<compile_context>
chip_gen: v6e
topology: v6e:2x2x1
jax: 0.10.0
libtpu: 0.0.40
codegen_flags: <defaults>
</compile_context>

<pallas_src>
import jax
import jax.numpy as jnp
from jax import lax
from jax.experimental import pallas as pl
from jax.experimental.pallas import tpu as pltpu

# --- SignTCN default hyperparameters ---
INPUT_DIM = 126
PADDED_DIM = 128            # lane-aligned input width
NUM_CLASSES = 15
NUM_CHANNELS = 64
KERNEL_SIZE = 3
DILATIONS = (1, 2, 4, 8)
HIDDEN = 64                 # fc1 output width


def sign_tcn_kernel(x_ref, fb_ref,
                    w0_ref, b0_ref,
                    wf_ref, bf_ref,
                    w1a_ref, w2_ref, b2_ref,
                    out_ref):
    Bt, T, Dp = x_ref.shape
    C = NUM_CHANNELS
    M = Bt * T

    # init_conv: 1x1 conv == matmul over channels, on the flattened (Bt*T, Dp) slab
    x2 = x_ref[...].reshape(M, Dp)
    h = jnp.dot(x2, w0_ref[...], preferred_element_type=jnp.float32) + b0_ref[...]

    # time index (within each batch row) of every row of the flattened slab;
    # masks are deduplicated per distinct shift and hoisted out of the block loop.
    t_idx = lax.broadcasted_iota(jnp.int32, (M, C), 0) % T
    all_shifts = sorted({d * k for d in DILATIONS for k in range(1, KERNEL_SIZE)})
    masks = {s: (t_idx >= s) for s in all_shifts if s < T}

    # dilated residual blocks: one fused (M, 4C) @ (4C, 2C) matmul per block.
    # Columns 0:C hold the causal-conv accumulation, columns C:2C the residual
    # 1x1 conv. Rolling the *flattened* slab is safe: rows that would leak
    # across batch boundaries are exactly the rows (t < s) zeroed by the mask.
    for i, d in enumerate(DILATIONS):
        taps = []
        for j in range(KERNEL_SIZE - 1):            # non-zero shifts, farthest tap first
            s = d * (KERNEL_SIZE - 1 - j)
            if s >= T:
                taps.append(jnp.zeros_like(h))      # tap entirely in the causal pad
            else:
                taps.append(jnp.where(masks[s],
                                      pltpu.roll(h, shift=s, axis=0),
                                      0.0))
        cat = jnp.concatenate(taps + [h, h], axis=-1)          # (M, 4C) = (M, 256)
        z = jnp.dot(cat, wf_ref[i], preferred_element_type=jnp.float32) + bf_ref[i]
        conv = jnp.maximum(z[:, :C], 0.0)           # ReLU(conv + cb); dropout == identity
        h = jnp.maximum(conv + z[:, C:], 0.0)       # ReLU(conv_out + residual)

    # AdaptiveMaxPool1d(1): max over time per batch row
    pooled = jnp.max(h.reshape(Bt, T, C), axis=1)               # (Bt, C)

    # fc1: pooled part on the MXU; feats part precomputed in the wrapper (fb_ref)
    h1 = jnp.maximum(
        jnp.dot(pooled, w1a_ref[...], preferred_element_type=jnp.float32) + fb_ref[...],
        0.0)
    logits = jnp.dot(h1, w2_ref[...], preferred_element_type=jnp.float32) + b2_ref[...]
    out_ref[...] = logits.astype(out_ref.dtype)


def sign_tcn_pallas(x, lengths, hand_fracs, params, block_b=8):
    """x: (B, T, INPUT_DIM); lengths: (B, 1); hand_fracs: (B, 2) -> logits (B, NUM_CLASSES)."""
    (w0, b0, cw, cb, rw, rb, w1a, w1b, b1, w2, b2) = params
    B, T, D = x.shape
    C, H, NC, NB, K = NUM_CHANNELS, HIDDEN, NUM_CLASSES, len(DILATIONS), KERNEL_SIZE

    # ---- host-side prep -------------------------------------------------
    # lane-align the input width 126 -> 128
    xp = jnp.pad(x, ((0, 0), (0, 0), (0, PADDED_DIM - D)))
    w0p = jnp.pad(w0, ((0, PADDED_DIM - D), (0, 0)))

    # feats branch of fc1 (K=3 matmul) computed here; enters the kernel as a bias
    feats = jnp.concatenate([lengths, hand_fracs], axis=1)      # (B, 3)
    fbias = feats @ w1b + b1                                    # (B, H)

    # fused per-block weight: rows = [tap0(shift 2d) | tap1(shift d) | tap2(shift 0) | residual]
    # cols = [conv output (0:C) | residual output (C:2C)]
    wf = jnp.zeros((NB, (K + 1) * C, 2 * C), jnp.float32)
    for j in range(K):
        wf = wf.at[:, j * C:(j + 1) * C, :C].set(cw[:, j])
    wf = wf.at[:, K * C:(K + 1) * C, C:].set(rw)
    bf = jnp.concatenate([cb, rb], axis=-1)                     # (NB, 1, 2C)

    # batch blocking
    Bt = min(block_b, B)
    nb = pl.cdiv(B, Bt)
    Bp = nb * Bt
    if Bp != B:
        xp = jnp.pad(xp, ((0, Bp - B), (0, 0), (0, 0)))
        fbias = jnp.pad(fbias, ((0, Bp - B), (0, 0)))

    def full(*shape):   # whole-array block, broadcast across the batch grid
        return pl.BlockSpec(shape, lambda b, _n=len(shape): (0,) * _n)

    out = pl.pallas_call(
        sign_tcn_kernel,
        out_shape=jax.ShapeDtypeStruct((Bp, NC), jnp.float32),
        grid_spec=pltpu.PrefetchScalarGridSpec(
            num_scalar_prefetch=0,
            grid=(nb,),
            in_specs=[
                pl.BlockSpec((Bt, T, PADDED_DIM), lambda b: (b, 0, 0)),   # x rows
                pl.BlockSpec((Bt, H), lambda b: (b, 0)),                  # fc1 feats-bias
                full(PADDED_DIM, C), full(1, C),                          # init_conv
                full(NB, (K + 1) * C, 2 * C), full(NB, 1, 2 * C),         # fused block weights
                full(C, H),                                               # fc1 (pooled part)
                full(H, NC), full(1, NC),                                 # fc2
            ],
            out_specs=pl.BlockSpec((Bt, NC), lambda b: (b, 0)),
        ),
        compiler_params=pltpu.CompilerParams(dimension_semantics=("parallel",)),
    )(xp, fbias, w0p, b0, wf, bf, w1a, w2, b2)
    return out[:B]


def init_params(key):
    """Deterministic synthetic parameters (kernel-friendly (in, out) layouts)."""
    C, D, K, NB, H, NC = NUM_CHANNELS, INPUT_DIM, KERNEL_SIZE, len(DILATIONS), HIDDEN, NUM_CLASSES
    ks = jax.random.split(key, 11)

    def rnd(k, shape, fan_in):
        return jax.random.normal(k, shape, jnp.float32) * (1.0 / jnp.sqrt(float(fan_in)))

    w0 = rnd(ks[0], (D, C), D)
    b0 = rnd(ks[1], (1, C), D)
    cw = rnd(ks[2], (NB, K, C, C), C * K)     # [block, tap, c_in, c_out]
    cb = rnd(ks[3], (NB, 1, C), C * K)
    rw = rnd(ks[4], (NB, C, C), C)            # [block, c_in, c_out]
    rb = rnd(ks[5], (NB, 1, C), C)
    w1a = rnd(ks[6], (C, H), C + 3)           # fc1 weight slice acting on pooled features
    w1b = rnd(ks[7], (3, H), C + 3)           # fc1 weight slice acting on [lengths, hand_fracs]
    b1 = rnd(ks[8], (1, H), C + 3)
    w2 = rnd(ks[9], (H, NC), H)
    b2 = rnd(ks[10], (1, NC), H)
    return (w0, b0, cw, cb, rw, rb, w1a, w1b, b1, w2, b2)


def ref_forward(x, feats, params):
    """Pure-JAX reference of SignTCN.forward (eval mode, dropout = identity)."""
    (w0, b0, cw, cb, rw, rb, w1a, w1b, b1, w2, b2) = params
    B, T, D = x.shape
    h = x @ w0 + b0                                            # (B, T, C)
    for i, d in enumerate(DILATIONS):
        acc = jnp.zeros_like(h)
        for j in range(KERNEL_SIZE):
            s = d * (KERNEL_SIZE - 1 - j)
            if s == 0:
                xs = h
            else:
                xs = jnp.pad(h, ((0, 0), (s, 0), (0, 0)))[:, :T, :]
            acc = acc + xs @ cw[i, j]
        conv = jax.nn.relu(acc + cb[i])
        res = h @ rw[i] + rb[i]
        h = jax.nn.relu(conv + res)
    pooled = h.max(axis=1)                                     # (B, C)
    h1 = jax.nn.relu(pooled @ w1a + feats @ w1b + b1)
    return h1 @ w2 + b2


if __name__ == "__main__":
    key = jax.random.PRNGKey(0)
    kx, kl, kh, kp = jax.random.split(key, 4)

    B, T = 2, 32
    x = jax.random.normal(kx, (B, T, INPUT_DIM), jnp.float32)      # (B, T, 126)
    lengths = jax.random.uniform(kl, (B, 1), jnp.float32)          # (B, 1)
    hand_fracs = jax.random.uniform(kh, (B, 2), jnp.float32)       # (B, 2)
    params = init_params(kp)

    out = sign_tcn_pallas(x, lengths, hand_fracs, params)
    out = jax.block_until_ready(out)

    ref = ref_forward(x, jnp.concatenate([lengths, hand_fracs], axis=1), params)
    assert out.shape == (B, NUM_CLASSES)
    assert jnp.allclose(out, ref, atol=1e-3, rtol=1e-3), (out, ref)
    print("KERNEL_OK")
</pallas_src>

<mosaic_0001>
module attributes {stable_mosaic.version = 11 : i64} {
  func.func @sign_tcn_kernel(%arg0: i32, %arg1: memref<2x32x128xf32, #tpu.memory_space<vmem>>, %arg2: memref<2x64xf32, #tpu.memory_space<vmem>>, %arg3: memref<128x64xf32, #tpu.memory_space<vmem>>, %arg4: memref<1x64xf32, #tpu.memory_space<vmem>>, %arg5: memref<4x256x128xf32, #tpu.memory_space<vmem>>, %arg6: memref<4x1x128xf32, #tpu.memory_space<vmem>>, %arg7: memref<64x64xf32, #tpu.memory_space<vmem>>, %arg8: memref<64x15xf32, #tpu.memory_space<vmem>>, %arg9: memref<1x15xf32, #tpu.memory_space<vmem>>, %arg10: memref<2x15xf32, #tpu.memory_space<vmem>>) attributes {dimension_semantics = [#tpu.dimension_semantics<parallel>], iteration_bounds = array<i64: 1>, scalar_prefetch = 0 : i64, scratch_operands = 0 : i64, tpu.core_type = #tpu.core_type<tc>, window_params = [{transform_indices = @transform_0, window_bounds = array<i64: 2, 32, 128>}, {transform_indices = @transform_1, window_bounds = array<i64: 2, 64>}, {pipeline_mode = #tpu.pipeline_mode<synchronous>, transform_indices = @transform_2, window_bounds = array<i64: 128, 64>}, {pipeline_mode = #tpu.pipeline_mode<synchronous>, transform_indices = @transform_3, window_bounds = array<i64: 1, 64>}, {pipeline_mode = #tpu.pipeline_mode<synchronous>, transform_indices = @transform_4, window_bounds = array<i64: 4, 256, 128>}, {pipeline_mode = #tpu.pipeline_mode<synchronous>, transform_indices = @transform_5, window_bounds = array<i64: 4, 1, 128>}, {pipeline_mode = #tpu.pipeline_mode<synchronous>, transform_indices = @transform_6, window_bounds = array<i64: 64, 64>}, {pipeline_mode = #tpu.pipeline_mode<synchronous>, transform_indices = @transform_7, window_bounds = array<i64: 64, 15>}, {pipeline_mode = #tpu.pipeline_mode<synchronous>, transform_indices = @transform_8, window_bounds = array<i64: 1, 15>}, {transform_indices = @transform_9, window_bounds = array<i64: 2, 15>}]} {
    %c0 = arith.constant 0 : index
    %c0_0 = arith.constant 0 : index
    %c0_1 = arith.constant 0 : index
    %0 = vector.load %arg1[%c0, %c0_0, %c0_1] : memref<2x32x128xf32, #tpu.memory_space<vmem>>, vector<2x32x128xf32>
    %1 = vector.shape_cast %0 : vector<2x32x128xf32> to vector<64x128xf32>
    %c0_2 = arith.constant 0 : index
    %c0_3 = arith.constant 0 : index
    %2 = vector.load %arg3[%c0_2, %c0_3] : memref<128x64xf32, #tpu.memory_space<vmem>>, vector<128x64xf32>
    %cst = arith.constant dense<0.000000e+00> : vector<64x64xf32>
    %3 = tpu.matmul %1, %2, %cst {dimension_numbers = #tpu.dot_dimension_numbers<[1], [0], [0], [1], [0, 0, 1, 1], [], []>} : vector<64x128xf32>, vector<128x64xf32>, vector<64x64xf32> -> vector<64x64xf32>
    %c0_4 = arith.constant 0 : index
    %c0_5 = arith.constant 0 : index
    %4 = vector.load %arg4[%c0_4, %c0_5] : memref<1x64xf32, #tpu.memory_space<vmem>>, vector<1x64xf32>
    %5 = vector.broadcast %4 : vector<1x64xf32> to vector<64x64xf32>
    %6 = arith.addf %3, %5 : vector<64x64xf32>
    %7 = tpu.iota {dimensions = array<i32: 0>} : vector<64x64xi32>
    %c32_i32 = arith.constant 32 : i32
    %c0_i32 = arith.constant 0 : i32
    %8 = arith.cmpi eq, %c32_i32, %c0_i32 : i32
    %c1_i32 = arith.constant 1 : i32
    %9 = arith.select %8, %c1_i32, %c32_i32 : i32
    %10 = vector.broadcast %9 : i32 to vector<64x64xi32>
    %11 = arith.remsi %7, %10 : vector<64x64xi32>
    %c0_i32_6 = arith.constant 0 : i32
    %12 = vector.broadcast %c0_i32_6 : i32 to vector<64x64xi32>
    %13 = arith.cmpi ne, %11, %12 : vector<64x64xi32>
    %c0_i32_7 = arith.constant 0 : i32
    %14 = vector.broadcast %c0_i32_7 : i32 to vector<64x64xi32>
    %15 = arith.cmpi slt, %11, %14 : vector<64x64xi32>
    %c0_i32_8 = arith.constant 0 : i32
    %16 = arith.cmpi slt, %9, %c0_i32_8 : i32
    %17 = vector.broadcast %16 : i1 to vector<64x64xi1>
    %18 = vector.broadcast %17 : vector<64x64xi1> to vector<64x64xi1>
    %19 = arith.xori %15, %18 : vector<64x64xi1>
    %20 = arith.andi %19, %13 : vector<64x64xi1>
    %21 = vector.broadcast %9 : i32 to vector<64x64xi32>
    %22 = arith.addi %11, %21 : vector<64x64xi32>
    %23 = arith.select %20, %22, %11 : vector<64x64xi1>, vector<64x64xi32>
    %c1_i32_9 = arith.constant 1 : i32
    %24 = vector.broadcast %c1_i32_9 : i32 to vector<64x64xi32>
    %25 = arith.cmpi sge, %23, %24 : vector<64x64xi32>
    %c2_i32 = arith.constant 2 : i32
    %26 = vector.broadcast %c2_i32 : i32 to vector<64x64xi32>
    %27 = arith.cmpi sge, %23, %26 : vector<64x64xi32>
    %c4_i32 = arith.constant 4 : i32
    %28 = vector.broadcast %c4_i32 : i32 to vector<64x64xi32>
    %29 = arith.cmpi sge, %23, %28 : vector<64x64xi32>
    %c8_i32 = arith.constant 8 : i32
    %30 = vector.broadcast %c8_i32 : i32 to vector<64x64xi32>
    %31 = arith.cmpi sge, %23, %30 : vector<64x64xi32>
    %c16_i32 = arith.constant 16 : i32
    %32 = vector.broadcast %c16_i32 : i32 to vector<64x64xi32>
    %33 = arith.cmpi sge, %23, %32 : vector<64x64xi32>
    %c2_i32_10 = arith.constant 2 : i32
    %34 = tpu.dynamic_rotate %6 by %c2_i32_10 dim 0 : vector<64x64xf32>, i32 -> vector<64x64xf32>
    %cst_11 = arith.constant 0.000000e+00 : f32
    %35 = vector.broadcast %cst_11 : f32 to vector<64x64xf32>
    %36 = arith.select %27, %34, %35 : vector<64x64xi1>, vector<64x64xf32>
    %c1_i32_12 = arith.constant 1 : i32
    %37 = tpu.dynamic_rotate %6 by %c1_i32_12 dim 0 : vector<64x64xf32>, i32 -> vector<64x64xf32>
    %cst_13 = arith.constant 0.000000e+00 : f32
    %38 = vector.broadcast %cst_13 : f32 to vector<64x64xf32>
    %39 = arith.select %25, %37, %38 : vector<64x64xi1>, vector<64x64xf32>
    %40 = tpu.concatenate %36, %39, %6, %6 in 1 : vector<64x64xf32>, vector<64x64xf32>, vector<64x64xf32>, vector<64x64xf32> -> vector<64x256xf32>
    %c0_14 = arith.constant 0 : index
    %c0_15 = arith.constant 0 : index
    %c0_16 = arith.constant 0 : index
    %41 = vector.load %arg5[%c0_14, %c0_15, %c0_16] : memref<4x256x128xf32, #tpu.memory_space<vmem>>, vector<1x256x128xf32>
    %42 = vector.shape_cast %41 : vector<1x256x128xf32> to vector<256x128xf32>
    %cst_17 = arith.constant dense<0.000000e+00> : vector<64x128xf32>
    %43 = tpu.matmul %40, %42, %cst_17 {dimension_numbers = #tpu.dot_dimension_numbers<[1], [0], [0], [1], [0, 0, 1, 1], [], []>} : vector<64x256xf32>, vector<256x128xf32>, vector<64x128xf32> -> vector<64x128xf32>
    %c0_18 = arith.constant 0 : index
    %c0_19 = arith.constant 0 : index
    %c0_20 = arith.constant 0 : index
    %44 = vector.load %arg6[%c0_18, %c0_19, %c0_20] : memref<4x1x128xf32, #tpu.memory_space<vmem>>, vector<1x1x128xf32>
    %45 = vector.shape_cast %44 : vector<1x1x128xf32> to vector<1x128xf32>
    %46 = vector.broadcast %45 : vector<1x128xf32> to vector<64x128xf32>
    %47 = arith.addf %43, %46 : vector<64x128xf32>
    %48 = vector.extract_strided_slice %47 {offsets = [0, 0], sizes = [64, 64], strides = [1, 1]} : vector<64x128xf32> to vector<64x64xf32>
    %cst_21 = arith.constant 0.000000e+00 : f32
    %49 = vector.broadcast %cst_21 : f32 to vector<64x64xf32>
    %50 = arith.maximumf %48, %49 : vector<64x64xf32>
    %51 = vector.extract_strided_slice %47 {offsets = [0, 64], sizes = [64, 64], strides = [1, 1]} : vector<64x128xf32> to vector<64x64xf32>
    %52 = arith.addf %50, %51 : vector<64x64xf32>
    %cst_22 = arith.constant 0.000000e+00 : f32
    %53 = vector.broadcast %cst_22 : f32 to vector<64x64xf32>
    %54 = arith.maximumf %52, %53 : vector<64x64xf32>
    %c4_i32_23 = arith.constant 4 : i32
    %55 = tpu.dynamic_rotate %54 by %c4_i32_23 dim 0 : vector<64x64xf32>, i32 -> vector<64x64xf32>
    %cst_24 = arith.constant 0.000000e+00 : f32
    %56 = vector.broadcast %cst_24 : f32 to vector<64x64xf32>
    %57 = arith.select %29, %55, %56 : vector<64x64xi1>, vector<64x64xf32>
    %c2_i32_25 = arith.constant 2 : i32
    %58 = tpu.dynamic_rotate %54 by %c2_i32_25 dim 0 : vector<64x64xf32>, i32 -> vector<64x64xf32>
    %cst_26 = arith.constant 0.000000e+00 : f32
    %59 = vector.broadcast %cst_26 : f32 to vector<64x64xf32>
    %60 = arith.select %27, %58, %59 : vector<64x64xi1>, vector<64x64xf32>
    %61 = tpu.concatenate %57, %60, %54, %54 in 1 : vector<64x64xf32>, vector<64x64xf32>, vector<64x64xf32>, vector<64x64xf32> -> vector<64x256xf32>
    %c1 = arith.constant 1 : index
    %c0_27 = arith.constant 0 : index
    %c0_28 = arith.constant 0 : index
    %62 = vector.load %arg5[%c1, %c0_27, %c0_28] : memref<4x256x128xf32, #tpu.memory_space<vmem>>, vector<1x256x128xf32>
    %63 = vector.shape_cast %62 : vector<1x256x128xf32> to vector<256x128xf32>
    %cst_29 = arith.constant dense<0.000000e+00> : vector<64x128xf32>
    %64 = tpu.matmul %61, %63, %cst_29 {dimension_numbers = #tpu.dot_dimension_numbers<[1], [0], [0], [1], [0, 0, 1, 1], [], []>} : vector<64x256xf32>, vector<256x128xf32>, vector<64x128xf32> -> vector<64x128xf32>
    %c1_30 = arith.constant 1 : index
    %c0_31 = arith.constant 0 : index
    %c0_32 = arith.constant 0 : index
    %65 = vector.load %arg6[%c1_30, %c0_31, %c0_32] : memref<4x1x128xf32, #tpu.memory_space<vmem>>, vector<1x1x128xf32>
    %66 = vector.shape_cast %65 : vector<1x1x128xf32> to vector<1x128xf32>
    %67 = vector.broadcast %66 : vector<1x128xf32> to vector<64x128xf32>
    %68 = arith.addf %64, %67 : vector<64x128xf32>
    %69 = vector.extract_strided_slice %68 {offsets = [0, 0], sizes = [64, 64], strides = [1, 1]} : vector<64x128xf32> to vector<64x64xf32>
    %cst_33 = arith.constant 0.000000e+00 : f32
    %70 = vector.broadcast %cst_33 : f32 to vector<64x64xf32>
    %71 = arith.maximumf %69, %70 : vector<64x64xf32>
    %72 = vector.extract_strided_slice %68 {offsets = [0, 64], sizes = [64, 64], strides = [1, 1]} : vector<64x128xf32> to vector<64x64xf32>
    %73 = arith.addf %71, %72 : vector<64x64xf32>
    %cst_34 = arith.constant 0.000000e+00 : f32
    %74 = vector.broadcast %cst_34 : f32 to vector<64x64xf32>
    %75 = arith.maximumf %73, %74 : vector<64x64xf32>
    %c8_i32_35 = arith.constant 8 : i32
    %76 = tpu.dynamic_rotate %75 by %c8_i32_35 dim 0 : vector<64x64xf32>, i32 -> vector<64x64xf32>
    %cst_36 = arith.constant 0.000000e+00 : f32
    %77 = vector.broadcast %cst_36 : f32 to vector<64x64xf32>
    %78 = arith.select %31, %76, %77 : vector<64x64xi1>, vector<64x64xf32>
    %c4_i32_37 = arith.constant 4 : i32
    %79 = tpu.dynamic_rotate %75 by %c4_i32_37 dim 0 : vector<64x64xf32>, i32 -> vector<64x64xf32>
    %cst_38 = arith.constant 0.000000e+00 : f32
    %80 = vector.broadcast %cst_38 : f32 to vector<64x64xf32>
    %81 = arith.select %29, %79, %80 : vector<64x64xi1>, vector<64x64xf32>
    %82 = tpu.concatenate %78, %81, %75, %75 in 1 : vector<64x64xf32>, vector<64x64xf32>, vector<64x64xf32>, vector<64x64xf32> -> vector<64x256xf32>
    %c2 = arith.constant 2 : index
    %c0_39 = arith.constant 0 : index
    %c0_40 = arith.constant 0 : index
    %83 = vector.load %arg5[%c2, %c0_39, %c0_40] : memref<4x256x128xf32, #tpu.memory_space<vmem>>, vector<1x256x128xf32>
    %84 = vector.shape_cast %83 : vector<1x256x128xf32> to vector<256x128xf32>
    %cst_41 = arith.constant dense<0.000000e+00> : vector<64x128xf32>
    %85 = tpu.matmul %82, %84, %cst_41 {dimension_numbers = #tpu.dot_dimension_numbers<[1], [0], [0], [1], [0, 0, 1, 1], [], []>} : vector<64x256xf32>, vector<256x128xf32>, vector<64x128xf32> -> vector<64x128xf32>
    %c2_42 = arith.constant 2 : index
    %c0_43 = arith.constant 0 : index
    %c0_44 = arith.constant 0 : index
    %86 = vector.load %arg6[%c2_42, %c0_43, %c0_44] : memref<4x1x128xf32, #tpu.memory_space<vmem>>, vector<1x1x128xf32>
    %87 = vector.shape_cast %86 : vector<1x1x128xf32> to vector<1x128xf32>
    %88 = vector.broadcast %87 : vector<1x128xf32> to vector<64x128xf32>
    %89 = arith.addf %85, %88 : vector<64x128xf32>
    %90 = vector.extract_strided_slice %89 {offsets = [0, 0], sizes = [64, 64], strides = [1, 1]} : vector<64x128xf32> to vector<64x64xf32>
    %cst_45 = arith.constant 0.000000e+00 : f32
    %91 = vector.broadcast %cst_45 : f32 to vector<64x64xf32>
    %92 = arith.maximumf %90, %91 : vector<64x64xf32>
    %93 = vector.extract_strided_slice %89 {offsets = [0, 64], sizes = [64, 64], strides = [1, 1]} : vector<64x128xf32> to vector<64x64xf32>
    %94 = arith.addf %92, %93 : vector<64x64xf32>
    %cst_46 = arith.constant 0.000000e+00 : f32
    %95 = vector.broadcast %cst_46 : f32 to vector<64x64xf32>
    %96 = arith.maximumf %94, %95 : vector<64x64xf32>
    %c16_i32_47 = arith.constant 16 : i32
    %97 = tpu.dynamic_rotate %96 by %c16_i32_47 dim 0 : vector<64x64xf32>, i32 -> vector<64x64xf32>
    %cst_48 = arith.constant 0.000000e+00 : f32
    %98 = vector.broadcast %cst_48 : f32 to vector<64x64xf32>
    %99 = arith.select %33, %97, %98 : vector<64x64xi1>, vector<64x64xf32>
    %c8_i32_49 = arith.constant 8 : i32
    %100 = tpu.dynamic_rotate %96 by %c8_i32_49 dim 0 : vector<64x64xf32>, i32 -> vector<64x64xf32>
    %cst_50 = arith.constant 0.000000e+00 : f32
    %101 = vector.broadcast %cst_50 : f32 to vector<64x64xf32>
    %102 = arith.select %31, %100, %101 : vector<64x64xi1>, vector<64x64xf32>
    %103 = tpu.concatenate %99, %102, %96, %96 in 1 : vector<64x64xf32>, vector<64x64xf32>, vector<64x64xf32>, vector<64x64xf32> -> vector<64x256xf32>
    %c3 = arith.constant 3 : index
    %c0_51 = arith.constant 0 : index
    %c0_52 = arith.constant 0 : index
    %104 = vector.load %arg5[%c3, %c0_51, %c0_52] : memref<4x256x128xf32, #tpu.memory_space<vmem>>, vector<1x256x128xf32>
    %105 = vector.shape_cast %104 : vector<1x256x128xf32> to vector<256x128xf32>
    %cst_53 = arith.constant dense<0.000000e+00> : vector<64x128xf32>
    %106 = tpu.matmul %103, %105, %cst_53 {dimension_numbers = #tpu.dot_dimension_numbers<[1], [0], [0], [1], [0, 0, 1, 1], [], []>} : vector<64x256xf32>, vector<256x128xf32>, vector<64x128xf32> -> vector<64x128xf32>
    %c3_54 = arith.constant 3 : index
    %c0_55 = arith.constant 0 : index
    %c0_56 = arith.constant 0 : index
    %107 = vector.load %arg6[%c3_54, %c0_55, %c0_56] : memref<4x1x128xf32, #tpu.memory_space<vmem>>, vector<1x1x128xf32>
    %108 = vector.shape_cast %107 : vector<1x1x128xf32> to vector<1x128xf32>
    %109 = vector.broadcast %108 : vector<1x128xf32> to vector<64x128xf32>
    %110 = arith.addf %106, %109 : vector<64x128xf32>
    %111 = vector.extract_strided_slice %110 {offsets = [0, 0], sizes = [64, 64], strides = [1, 1]} : vector<64x128xf32> to vector<64x64xf32>
    %cst_57 = arith.constant 0.000000e+00 : f32
    %112 = vector.broadcast %cst_57 : f32 to vector<64x64xf32>
    %113 = arith.maximumf %111, %112 : vector<64x64xf32>
    %114 = vector.extract_strided_slice %110 {offsets = [0, 64], sizes = [64, 64], strides = [1, 1]} : vector<64x128xf32> to vector<64x64xf32>
    %115 = arith.addf %113, %114 : vector<64x64xf32>
    %cst_58 = arith.constant 0.000000e+00 : f32
    %116 = vector.broadcast %cst_58 : f32 to vector<64x64xf32>
    %117 = arith.maximumf %115, %116 : vector<64x64xf32>
    %118 = vector.shape_cast %117 : vector<64x64xf32> to vector<2x32x64xf32>
    %cst_59 = arith.constant dense<0xFF800000> : vector<2x64xf32>
    %119 = vector.multi_reduction <maximumf>, %118, %cst_59 [1] : vector<2x32x64xf32> to vector<2x64xf32>
    %c0_60 = arith.constant 0 : index
    %c0_61 = arith.constant 0 : index
    %120 = vector.load %arg7[%c0_60, %c0_61] : memref<64x64xf32, #tpu.memory_space<vmem>>, vector<64x64xf32>
    %cst_62 = arith.constant dense<0.000000e+00> : vector<2x64xf32>
    %121 = tpu.matmul %119, %120, %cst_62 {dimension_numbers = #tpu.dot_dimension_numbers<[1], [0], [0], [1], [0, 0, 1, 1], [], []>} : vector<2x64xf32>, vector<64x64xf32>, vector<2x64xf32> -> vector<2x64xf32>
    %c0_63 = arith.constant 0 : index
    %c0_64 = arith.constant 0 : index
    %122 = vector.load %arg2[%c0_63, %c0_64] : memref<2x64xf32, #tpu.memory_space<vmem>>, vector<2x64xf32>
    %123 = arith.addf %121, %122 : vector<2x64xf32>
    %cst_65 = arith.constant 0.000000e+00 : f32
    %124 = vector.broadcast %cst_65 : f32 to vector<2x64xf32>
    %125 = arith.maximumf %123, %124 : vector<2x64xf32>
    %c0_66 = arith.constant 0 : index
    %c0_67 = arith.constant 0 : index
    %126 = vector.load %arg8[%c0_66, %c0_67] : memref<64x15xf32, #tpu.memory_space<vmem>>, vector<64x15xf32>
    %cst_68 = arith.constant dense<0.000000e+00> : vector<2x15xf32>
    %127 = tpu.matmul %125, %126, %cst_68 {dimension_numbers = #tpu.dot_dimension_numbers<[1], [0], [0], [1], [0, 0, 1, 1], [], []>} : vector<2x64xf32>, vector<64x15xf32>, vector<2x15xf32> -> vector<2x15xf32>
    %c0_69 = arith.constant 0 : index
    %c0_70 = arith.constant 0 : index
    %128 = vector.load %arg9[%c0_69, %c0_70] : memref<1x15xf32, #tpu.memory_space<vmem>>, vector<1x15xf32>
    %129 = vector.broadcast %128 : vector<1x15xf32> to vector<2x15xf32>
    %130 = arith.addf %127, %129 : vector<2x15xf32>
    %c0_71 = arith.constant 0 : index
    %c0_72 = arith.constant 0 : index
    %131 = vector.load %arg10[%c0_71, %c0_72] : memref<2x15xf32, #tpu.memory_space<vmem>>, vector<2x15xf32>
    tpu.vector_store %arg10[%c0_71, %c0_72], %130 {strides = array<i32>} : memref<2x15xf32, #tpu.memory_space<vmem>>, vector<2x15xf32>,
    return
  }
  func.func @transform_0(%arg0: i32) -> (i32, i32, i32) {
    %c0_i32 = arith.constant 0 : i32
    %c0_i32_0 = arith.constant 0 : i32
    %c0_i32_1 = arith.constant 0 : i32
    return %arg0, %c0_i32, %c0_i32_0 : i32, i32, i32
  }
  func.func @transform_1(%arg0: i32) -> (i32, i32) {
    %c0_i32 = arith.constant 0 : i32
    %c0_i32_0 = arith.constant 0 : i32
    return %arg0, %c0_i32 : i32, i32
  }
  func.func @transform_2(%arg0: i32) -> (i32, i32) {
    %c0_i32 = arith.constant 0 : i32
    %c0_i32_0 = arith.constant 0 : i32
    %c0_i32_1 = arith.constant 0 : i32
    return %c0_i32, %c0_i32_0 : i32, i32
  }
  func.func @transform_3(%arg0: i32) -> (i32, i32) {
    %c0_i32 = arith.constant 0 : i32
    %c0_i32_0 = arith.constant 0 : i32
    %c0_i32_1 = arith.constant 0 : i32
    return %c0_i32, %c0_i32_0 : i32, i32
  }
  func.func @transform_4(%arg0: i32) -> (i32, i32, i32) {
    %c0_i32 = arith.constant 0 : i32
    %c0_i32_0 = arith.constant 0 : i32
    %c0_i32_1 = arith.constant 0 : i32
    %c0_i32_2 = arith.constant 0 : i32
    return %c0_i32, %c0_i32_0, %c0_i32_1 : i32, i32, i32
  }
  func.func @transform_5(%arg0: i32) -> (i32, i32, i32) {
    %c0_i32 = arith.constant 0 : i32
    %c0_i32_0 = arith.constant 0 : i32
    %c0_i32_1 = arith.constant 0 : i32
    %c0_i32_2 = arith.constant 0 : i32
    return %c0_i32, %c0_i32_0, %c0_i32_1 : i32, i32, i32
  }
  func.func @transform_6(%arg0: i32) -> (i32, i32) {
    %c0_i32 = arith.constant 0 : i32
    %c0_i32_0 = arith.constant 0 : i32
    %c0_i32_1 = arith.constant 0 : i32
    return %c0_i32, %c0_i32_0 : i32, i32
  }
  func.func @transform_7(%arg0: i32) -> (i32, i32) {
    %c0_i32 = arith.constant 0 : i32
    %c0_i32_0 = arith.constant 0 : i32
    %c0_i32_1 = arith.constant 0 : i32
    return %c0_i32, %c0_i32_0 : i32, i32
  }
  func.func @transform_8(%arg0: i32) -> (i32, i32) {
    %c0_i32 = arith.constant 0 : i32
    %c0_i32_0 = arith.constant 0 : i32
    %c0_i32_1 = arith.constant 0 : i32
    return %c0_i32, %c0_i32_0 : i32, i32
  }
  func.func @transform_9(%arg0: i32) -> (i32, i32) {
    %c0_i32 = arith.constant 0 : i32
    %c0_i32_0 = arith.constant 0 : i32
    return %arg0, %c0_i32 : i32, i32
  }
}

</mosaic_0001>

<llo_original>
// kernel: tpu_custom_call.1
$region0: #{tpu_custom_call.1}
  #allocation0 [shape = 'u32[]', space=smem, size = 0x4, offset = 0x4, fixed_abs, tag = 'smem constant byte address 0x4 - core index']
  #allocation1 [shape = 'u32[144,128]{1,0:T(1,128)}', space=vmem, size = 0x12000, scoped, tag = 'internal scratch']
  %s0 = inlined_call_operand.vmem [shape: f32[2,32,128], index: 0, kind: input, shape index: {}]
  %s1 = inlined_call_operand.vmem [shape: f32[2,64], index: 1, kind: input, shape index: {}]
  %s2 = inlined_call_operand.vmem [shape: f32[128,64], index: 2, kind: input, shape index: {}]
  %s3 = inlined_call_operand.vmem [shape: f32[1,64], index: 3, kind: input, shape index: {}]
  %s4 = inlined_call_operand.hbm [shape: f32[4,256,128], index: 4, kind: input, shape index: {}]
  %s5 = inlined_call_operand.vmem [shape: f32[4,1,128], index: 5, kind: input, shape index: {}]
  %s6 = inlined_call_operand.vmem [shape: f32[64,64], index: 6, kind: input, shape index: {}]
  %s7 = inlined_call_operand.vmem [shape: f32[64,15], index: 7, kind: input, shape index: {}]
  %s8 = inlined_call_operand.vmem [shape: f32[1,15], index: 8, kind: input, shape index: {}]
  %s9 = inlined_call_operand.hbm [shape: f32[2,15], index: 9, kind: output, shape index: {}]
  %s10 = sld [smem:[#allocation0]]
  $region50: #{tpu_custom_call.1} parent=0
    _
  %s12 = ssub.s32 1, %s10
  %s13 = scalar_select 0, %s12, %s10
  $region1: #{tpu_custom_call.1} parent=0
    #allocation2 [shape = 'u8[524288]{0}', space=vmem, size = 0x80000, scoped, tag = 'input window, operand 4, single buffered']
    #allocation3 [shape = 's32[1]{0}', space=sflag, size = 0x4, scoped, tag = 'scoped memory for tpu_custom_call.1']
    #allocation4 [shape = 's32[1]{0}', space=sflag, size = 0x4, scoped, tag = 'scoped memory for tpu_custom_call.1']
    #allocation5 [shape = 'u8[1024]{0}', space=vmem, size = 0x400, scoped, tag = 'output window, operand 0, single buffered']
    %14 = vsyncpa [#allocation3], 0
    %15 = vsyncpa [#allocation4], 0
    // Predicated region
    $region2: #{tpu_custom_call.1} parent=1 // pred_check
      _
    $region3: #{tpu_custom_call.1} parent=1 // pred_check_branch
      %17 = sbr.rel (0) target = $region5
    $region4: #{tpu_custom_call.1} parent=1 // pred_region
      _
    $region5: #{tpu_custom_call.1} parent=1 // pred_fallthru
      _
    // Predicated region
    $region6: #{tpu_custom_call.1} parent=1 // pred_check
      _
    $region7: #{tpu_custom_call.1} parent=1 // pred_check_branch
      %19 = sbr.rel (0) target = $region9
    $region8: #{tpu_custom_call.1} parent=1 // pred_region
      _
    $region9: #{tpu_custom_call.1} parent=1 // pred_fallthru
      _
    // Predicated region
    $region10: #{tpu_custom_call.1} parent=1 // pred_check
      _
    $region11: #{tpu_custom_call.1} parent=1 // pred_check_branch
      %21 = sbr.rel (0) target = $region13
    $region12: #{tpu_custom_call.1} parent=1 // pred_region
      _
    $region13: #{tpu_custom_call.1} parent=1 // pred_fallthru
      _
    // Predicated region
    $region14: #{tpu_custom_call.1} parent=1 // pred_check
      _
    $region15: #{tpu_custom_call.1} parent=1 // pred_check_branch
      %23 = sbr.rel (0) target = $region17
    $region16: #{tpu_custom_call.1} parent=1 // pred_region
      _
    $region17: #{tpu_custom_call.1} parent=1 // pred_fallthru
      _
    // Predicated region
    $region18: #{tpu_custom_call.1} parent=1 // pred_check
      _
    $region19: #{tpu_custom_call.1} parent=1 // pred_check_branch
      %25 = sbr.rel (0) target = $region21
    $region20: #{tpu_custom_call.1} parent=1 // pred_region
      %s27 = ssub.s32 16384, 16384
      %28 = vsyncadd [#allocation3], %s27
      %s29 = sshll.u32 [#allocation2], 4
      %s30 = int_to_ptr.vmem [resolvable:$true] %s29
      %35 = dma.hbm_to_vmem [thread:$0]  %s4, 16384, %s30, [#allocation3], 128, 128, 8
    $region21: #{tpu_custom_call.1} parent=1 // pred_fallthru
      _
    // Predicated region
    $region22: #{tpu_custom_call.1} parent=1 // pred_check
      _
    $region23: #{tpu_custom_call.1} parent=1 // pred_check_branch
      %37 = sbr.rel (0) target = $region25
    $region24: #{tpu_custom_call.1} parent=1 // pred_region
      _
    $region25: #{tpu_custom_call.1} parent=1 // pred_fallthru
      _
    // Predicated region
    $region26: #{tpu_custom_call.1} parent=1 // pred_check
      _
    $region27: #{tpu_custom_call.1} parent=1 // pred_check_branch
      %39 = sbr.rel (0) target = $region29
    $region28: #{tpu_custom_call.1} parent=1 // pred_region
      _
    $region29: #{tpu_custom_call.1} parent=1 // pred_fallthru
      _
    // Predicated region
    $region30: #{tpu_custom_call.1} parent=1 // pred_check
      _
    $region31: #{tpu_custom_call.1} parent=1 // pred_check_branch
      %41 = sbr.rel (0) target = $region33
    $region32: #{tpu_custom_call.1} parent=1 // pred_region
      _
    $region33: #{tpu_custom_call.1} parent=1 // pred_fallthru
      _
    // Predicated region
    $region34: #{tpu_custom_call.1} parent=1 // pred_check
      _
    $region35: #{tpu_custom_call.1} parent=1 // pred_check_branch
      %43 = sbr.rel (0) target = $region37
    $region36: #{tpu_custom_call.1} parent=1 // pred_region
      _
    $region37: #{tpu_custom_call.1} parent=1 // pred_fallthru
      _
    // Predicated region
    $region38: #{tpu_custom_call.1} parent=1 // pred_check
      _
    $region39: #{tpu_custom_call.1} parent=1 // pred_check_branch
      %45 = sbr.rel (0) target = $region41
    $region40: #{tpu_custom_call.1} parent=1 // pred_region
      %46 = dma.done [#allocation3], 16384
    $region41: #{tpu_custom_call.1} parent=1 // pred_fallthru
      _
    %v47 = vld [vmem:[%s0] sm:$0xff]
    %v48 = vld [vmem:[%s0 + $0x8] sm:$0xff]
    %v49 = vld [vmem:[%s0 + $0x10] sm:$0xff]
    %v50 = vld [vmem:[%s0 + $0x18] sm:$0xff]
    %v51 = vld [vmem:[%s0 + $0x20] sm:$0xff]
    %v52 = vld [vmem:[%s0 + $0x28] sm:$0xff]
    %v53 = vld [vmem:[%s0 + $0x30] sm:$0xff]
    %v54 = vld [vmem:[%s0 + $0x38] sm:$0xff]
    %v55 = vld [vmem:[%s2] sm:$0xff]
    %v56 = vld [vmem:[%s2 + $0x8] sm:$0xff]
    %v57 = vld [vmem:[%s2 + $0x10] sm:$0xff]
    %v58 = vld [vmem:[%s2 + $0x18] sm:$0xff]
    %v59 = vld [vmem:[%s2 + $0x20] sm:$0xff]
    %v60 = vld [vmem:[%s2 + $0x28] sm:$0xff]
    %v61 = vld [vmem:[%s2 + $0x30] sm:$0xff]
    %v62 = vld [vmem:[%s2 + $0x38] sm:$0xff]
    %v63 = vld [vmem:[%s2 + $0x40] sm:$0xff]
    %v64 = vld [vmem:[%s2 + $0x48] sm:$0xff]
    %v65 = vld [vmem:[%s2 + $0x50] sm:$0xff]
    %v66 = vld [vmem:[%s2 + $0x58] sm:$0xff]
    %v67 = vld [vmem:[%s2 + $0x60] sm:$0xff]
    %v68 = vld [vmem:[%s2 + $0x68] sm:$0xff]
    %v69 = vld [vmem:[%s2 + $0x70] sm:$0xff]
    %v70 = vld [vmem:[%s2 + $0x78] sm:$0xff]
    %v71 = vld [vmem:[%s3] sm:$0x1]
    %v73 = vlaneseq
    %v74 = vshrl.u32 %v73, 7
    %v75 = vsub.s32 0, %v74
    %v76 = vrot.slane %v71, %v75
    %78 = vmatprep.subr.mxu0 0.0
    %79 = vmatpush1.msra.mxu0 %v70
    %80 = vmatprep.subr.mxu0 0.0
    %81 = vmatpush1.msra.mxu0 %v69
    %82 = vmatprep.subr.mxu0 0.0
    %83 = vmatpush1.msra.mxu0 %v68
    %84 = vmatprep.subr.mxu0 0.0
    %85 = vmatpush1.msra.mxu0 %v67
    %86 = vmatprep.subr.mxu0 0.0
    %87 = vmatpush1.msra.mxu0 %v66
    %88 = vmatprep.subr.mxu0 0.0
    %89 = vmatpush1.msra.mxu0 %v65
    %90 = vmatprep.subr.mxu0 0.0
    %91 = vmatpush1.msra.mxu0 %v64
    %92 = vmatprep.subr.mxu0 0.0
    %93 = vmatpush1.msra.mxu0 %v63
    %94 = vmatprep.subr.mxu0 0.0
    %95 = vmatpush1.msra.mxu0 %v62
    %96 = vmatprep.subr.mxu0 0.0
    %97 = vmatpush1.msra.mxu0 %v61
    %98 = vmatprep.subr.mxu0 0.0
    %99 = vmatpush1.msra.mxu0 %v60
    %100 = vmatprep.subr.mxu0 0.0
    %101 = vmatpush1.msra.mxu0 %v59
    %102 = vmatprep.subr.mxu0 0.0
    %103 = vmatpush1.msra.mxu0 %v58
    %104 = vmatprep.subr.mxu0 0.0
    %105 = vmatpush1.msra.mxu0 %v57
    %106 = vmatprep.subr.mxu0 0.0
    %107 = vmatpush1.msra.mxu0 %v56
    %108 = vmatprep.subr.mxu0 0.0
    %109 = vmatpush1.msra.mxu0 %v55
    %110 = vmatprep.subr.mxu0 0.0
    %111 = vmatpush2.msra.mxu0 0.0
    %112 = vmatprep.subr.mxu0 0.0
    %113 = vmatpush2.msra.mxu0 0.0
    %114 = vmatprep.subr.mxu0 0.0
    %115 = vmatpush2.msra.mxu0 0.0
    %116 = vmatprep.subr.mxu0 0.0
    %117 = vmatpush2.msra.mxu0 0.0
    %118 = vmatprep.subr.mxu0 0.0
    %119 = vmatpush2.msra.mxu0 0.0
    %120 = vmatprep.subr.mxu0 0.0
    %121 = vmatpush2.msra.mxu0 0.0
    %122 = vmatprep.subr.mxu0 0.0
    %123 = vmatpush2.msra.mxu0 0.0
    %124 = vmatprep.subr.mxu0 0.0
    %125 = vmatpush2.msra.mxu0 0.0
    %126 = vmatprep.subr.mxu0 0.0
    %127 = vmatpush2.msra.mxu0 0.0
    %128 = vmatprep.subr.mxu0 0.0
    %129 = vmatpush2.msra.mxu0 0.0
    %130 = vmatprep.subr.mxu0 0.0
    %131 = vmatpush2.msra.mxu0 0.0
    %132 = vmatprep.subr.mxu0 0.0
    %133 = vmatpush2.msra.mxu0 0.0
    %134 = vmatprep.subr.mxu0 0.0
    %135 = vmatpush2.msra.mxu0 0.0
    %136 = vmatprep.subr.mxu0 0.0
    %137 = vmatpush2.msra.mxu0 0.0
    %138 = vmatprep.subr.mxu0 0.0
    %139 = vmatpush2.msra.mxu0 0.0
    %140 = vmatprep.subr.mxu0 0.0
    %141 = vmatpush2.msra.mxu0 0.0
    %142 = vmatprep.mubr.f32.mxu0 0.0
    %143 = vmatmul.mubr.f32.gmra.mxu0 %v47
    %v144 = vpop.f32.mrf.mxu0
    %v145 = vadd.f32 %v76, %v144
    %v146 = vpop.f32.mrf.mxu0
    %147 = vmatprep.mubr.f32.mxu0 0.0
    %148 = vmatmul.mubr.f32.gmra.mxu0 %v48
    %v149 = vpop.f32.mrf.mxu0
    %v150 = vadd.f32 %v76, %v149
    %v151 = vpop.f32.mrf.mxu0
    %152 = vmatprep.mubr.f32.mxu0 0.0
    %153 = vmatmul.mubr.f32.gmra.mxu0 %v49
    %v154 = vpop.f32.mrf.mxu0
    %v155 = vadd.f32 %v76, %v154
    %v156 = vpop.f32.mrf.mxu0
    %157 = vmatprep.mubr.f32.mxu0 0.0
    %158 = vmatmul.mubr.f32.gmra.mxu0 %v50
    %v159 = vpop.f32.mrf.mxu0
    %v160 = vadd.f32 %v76, %v159
    %v161 = vpop.f32.mrf.mxu0
    %162 = vmatprep.mubr.f32.mxu0 0.0
    %163 = vmatmul.mubr.f32.gmra.mxu0 %v51
    %v164 = vpop.f32.mrf.mxu0
    %v165 = vadd.f32 %v76, %v164
    %v166 = vpop.f32.mrf.mxu0
    %167 = vmatprep.mubr.f32.mxu0 0.0
    %168 = vmatmul.mubr.f32.gmra.mxu0 %v52
    %v169 = vpop.f32.mrf.mxu0
    %v170 = vadd.f32 %v76, %v169
    %v171 = vpop.f32.mrf.mxu0
    %172 = vmatprep.mubr.f32.mxu0 0.0
    %173 = vmatmul.mubr.f32.gmra.mxu0 %v53
    %v174 = vpop.f32.mrf.mxu0
    %v175 = vadd.f32 %v76, %v174
    %v176 = vpop.f32.mrf.mxu0
    %177 = vmatprep.mubr.f32.mxu0 0.0
    %178 = vmatmul.mubr.f32.gmra.mxu0 %v54
    %v179 = vpop.f32.mrf.mxu0
    %v180 = vadd.f32 %v76, %v179
    %v181 = vpop.f32.mrf.mxu0
    %182 = vdwg.mxu0
    %v183 = vlaneseq
    %v184 = vshrl.u32 %v183, 7
    %v185 = vadd.s32 %v184, 8
    %v186 = vadd.s32 %v184, 16
    %v187 = vadd.s32 %v184, 24
    %v188 = vadd.s32 %v184, 32
    %v189 = vadd.s32 %v184, 40
    %v190 = vadd.s32 %v184, 48
    %v191 = vadd.s32 %v184, 56
    %vm192 = vcmp.lt.s32.totalorder %v184, 0
    %v193 = vsub.s32 0, %v184
    %v194 = vsel %vm192, %v193, %v184
    %v195 = vshrl.u32 %v194, 5
    %v196 = vand.u32 %v194, 31
    %v197 = vsub.s32 0, %v196
    %v198 = vsel %vm192, %v197, %v196
    %vm199 = vcmp.lt.s32.totalorder %v185, 0
    %v200 = vsub.s32 0, %v185
    %v201 = vsel %vm199, %v200, %v185
    %v202 = vshrl.u32 %v201, 5
    %v203 = vand.u32 %v201, 31
    %v204 = vsub.s32 0, %v203
    %v205 = vsel %vm199, %v204, %v203
    %vm206 = vcmp.lt.s32.totalorder %v186, 0
    %v207 = vsub.s32 0, %v186
    %v208 = vsel %vm206, %v207, %v186
    %v209 = vshrl.u32 %v208, 5
    %v210 = vand.u32 %v208, 31
    %v211 = vsub.s32 0, %v210
    %v212 = vsel %vm206, %v211, %v210
    %vm213 = vcmp.lt.s32.totalorder %v187, 0
    %v214 = vsub.s32 0, %v187
    %v215 = vsel %vm213, %v214, %v187
    %v216 = vshrl.u32 %v215, 5
    %v217 = vand.u32 %v215, 31
    %v218 = vsub.s32 0, %v217
    %v219 = vsel %vm213, %v218, %v217
    %vm220 = vcmp.lt.s32.totalorder %v188, 0
    %v221 = vsub.s32 0, %v188
    %v222 = vsel %vm220, %v221, %v188
    %v223 = vshrl.u32 %v222, 5
    %v224 = vand.u32 %v222, 31
    %v225 = vsub.s32 0, %v224
    %v226 = vsel %vm220, %v225, %v224
    %vm227 = vcmp.lt.s32.totalorder %v189, 0
    %v228 = vsub.s32 0, %v189
    %v229 = vsel %vm227, %v228, %v189
    %v230 = vshrl.u32 %v229, 5
    %v231 = vand.u32 %v229, 31
    %v232 = vsub.s32 0, %v231
    %v233 = vsel %vm227, %v232, %v231
    %vm234 = vcmp.lt.s32.totalorder %v190, 0
    %v235 = vsub.s32 0, %v190
    %v236 = vsel %vm234, %v235, %v190
    %v237 = vshrl.u32 %v236, 5
    %v238 = vand.u32 %v236, 31
    %v239 = vsub.s32 0, %v238
    %v240 = vsel %vm234, %v239, %v238
    %vm241 = vcmp.lt.s32.totalorder %v191, 0
    %v242 = vsub.s32 0, %v191
    %v243 = vsel %vm241, %v242, %v191
    %v244 = vshrl.u32 %v243, 5
    %v245 = vand.u32 %v243, 31
    %v246 = vsub.s32 0, %v245
    %v247 = vsel %vm241, %v246, %v245
    %vm248 = vcmp.ne.s32.totalorder %v198, 0
    %vm249 = vcmp.ne.s32.totalorder %v205, 0
    %vm250 = vcmp.ne.s32.totalorder %v212, 0
    %vm251 = vcmp.ne.s32.totalorder %v219, 0
    %vm252 = vcmp.ne.s32.totalorder %v226, 0
    %vm253 = vcmp.ne.s32.totalorder %v233, 0
    %vm254 = vcmp.ne.s32.totalorder %v240, 0
    %vm255 = vcmp.ne.s32.totalorder %v247, 0
    %vm256 = vcmp.lt.s32.totalorder %v198, 0
    %vm257 = vcmp.lt.s32.totalorder %v205, 0
    %vm258 = vcmp.lt.s32.totalorder %v212, 0
    %vm259 = vcmp.lt.s32.totalorder %v219, 0
    %vm260 = vcmp.lt.s32.totalorder %v226, 0
    %vm261 = vcmp.lt.s32.totalorder %v233, 0
    %vm262 = vcmp.lt.s32.totalorder %v240, 0
    %vm263 = vcmp.lt.s32.totalorder %v247, 0
    %vm264 = vmand %vm256, %vm248
    %vm265 = vmand %vm257, %vm249
    %vm266 = vmand %vm258, %vm250
    %vm267 = vmand %vm259, %vm251
    %vm268 = vmand %vm260, %vm252
    %vm269 = vmand %vm261, %vm253
    %vm270 = vmand %vm262, %vm254
    %vm271 = vmand %vm263, %vm255
    %v272 = vadd.s32 %v198, 32
    %v273 = vadd.s32 %v205, 32
    %v274 = vadd.s32 %v212, 32
    %v275 = vadd.s32 %v219, 32
    %v276 = vadd.s32 %v226, 32
    %v277 = vadd.s32 %v233, 32
    %v278 = vadd.s32 %v240, 32
    %v279 = vadd.s32 %v247, 32
    %v280 = vsel %vm264, %v272, %v198
    %v281 = vsel %vm265, %v273, %v205
    %v282 = vsel %vm266, %v274, %v212
    %v283 = vsel %vm267, %v275, %v219
    %v284 = vsel %vm268, %v276, %v226
    %v285 = vsel %vm269, %v277, %v233
    %v286 = vsel %vm270, %v278, %v240
    %v287 = vsel %vm271, %v279, %v247
    %vm288 = vcmp.ge.s32.totalorder %v280, 1
    %vm289 = vcmp.ge.s32.totalorder %v281, 1
    %vm290 = vcmp.ge.s32.totalorder %v282, 1
    %vm291 = vcmp.ge.s32.totalorder %v283, 1
    %vm292 = vcmp.ge.s32.totalorder %v284, 1
    %vm293 = vcmp.ge.s32.totalorder %v285, 1
    %vm294 = vcmp.ge.s32.totalorder %v286, 1
    %vm295 = vcmp.ge.s32.totalorder %v287, 1
    %vm296 = vcmp.ge.s32.totalorder %v280, 2
    %vm297 = vcmp.ge.s32.totalorder %v281, 2
    %vm298 = vcmp.ge.s32.totalorder %v282, 2
    %vm299 = vcmp.ge.s32.totalorder %v283, 2
    %vm300 = vcmp.ge.s32.totalorder %v284, 2
    %vm301 = vcmp.ge.s32.totalorder %v285, 2
    %vm302 = vcmp.ge.s32.totalorder %v286, 2
    %vm303 = vcmp.ge.s32.totalorder %v287, 2
    %vm304 = vcmp.ge.s32.totalorder %v280, 4
    %vm305 = vcmp.ge.s32.totalorder %v281, 4
    %vm306 = vcmp.ge.s32.totalorder %v282, 4
    %vm307 = vcmp.ge.s32.totalorder %v283, 4
    %vm308 = vcmp.ge.s32.totalorder %v284, 4
    %vm309 = vcmp.ge.s32.totalorder %v285, 4
    %vm310 = vcmp.ge.s32.totalorder %v286, 4
    %vm311 = vcmp.ge.s32.totalorder %v287, 4
    %vm312 = vcmp.ge.s32.totalorder %v280, 8
    %vm313 = vcmp.ge.s32.totalorder %v281, 8
    %vm314 = vcmp.ge.s32.totalorder %v282, 8
    %vm315 = vcmp.ge.s32.totalorder %v283, 8
    %vm316 = vcmp.ge.s32.totalorder %v284, 8
    %vm317 = vcmp.ge.s32.totalorder %v285, 8
    %vm318 = vcmp.ge.s32.totalorder %v286, 8
    %vm319 = vcmp.ge.s32.totalorder %v287, 8
    %vm320 = vcmp.ge.s32.totalorder %v280, 16
    %vm321 = vcmp.ge.s32.totalorder %v281, 16
    %vm322 = vcmp.ge.s32.totalorder %v282, 16
    %vm323 = vcmp.ge.s32.totalorder %v283, 16
    %vm324 = vcmp.ge.s32.totalorder %v284, 16
    %vm325 = vcmp.ge.s32.totalorder %v285, 16
    %vm326 = vcmp.ge.s32.totalorder %v286, 16
    %vm327 = vcmp.ge.s32.totalorder %v287, 16
    %v328 = vrot.slane %v145, 6
    %v329 = vrot.slane %v150, 6
    %v330 = vrot.slane %v155, 6
    %v331 = vrot.slane %v160, 6
    %v332 = vrot.slane %v165, 6
    %v333 = vrot.slane %v170, 6
    %v334 = vrot.slane %v175, 6
    %v335 = vrot.slane %v180, 6
    %vm336 = vcmp.lt.s32.totalorder %v184, 2
    %v337 = vsel %vm336, %v334, %v335
    %v338 = vsel %vm336, %v333, %v334
    %v339 = vsel %vm336, %v332, %v333
    %v340 = vsel %vm336, %v331, %v332
    %v341 = vsel %vm336, %v330, %v331
    %v342 = vsel %vm336, %v329, %v330
    %v343 = vsel %vm336, %v328, %v329
    %v344 = vsel %vm336, %v335, %v328
    %v345 = vsel %vm296, %v344, 0.0
    %v346 = vsel %vm297, %v343, 0.0
    %v347 = vsel %vm298, %v342, 0.0
    %v348 = vsel %vm299, %v341, 0.0
    %v349 = vsel %vm300, %v340, 0.0
    %v350 = vsel %vm301, %v339, 0.0
    %v351 = vsel %vm302, %v338, 0.0
    %v352 = vsel %vm303, %v337, 0.0
    %v353 = vrot.slane %v145, 7
    %v354 = vrot.slane %v150, 7
    %v355 = vrot.slane %v155, 7
    %v356 = vrot.slane %v160, 7
    %v357 = vrot.slane %v165, 7
    %v358 = vrot.slane %v170, 7
    %v359 = vrot.slane %v175, 7
    %v360 = vrot.slane %v180, 7
    %vm361 = vcmp.lt.s32.totalorder %v184, 1
    %v362 = vsel %vm361, %v359, %v360
    %v363 = vsel %vm361, %v358, %v359
    %v364 = vsel %vm361, %v357, %v358
    %v365 = vsel %vm361, %v356, %v357
    %v366 = vsel %vm361, %v355, %v356
    %v367 = vsel %vm361, %v354, %v355
    %v368 = vsel %vm361, %v353, %v354
    %v369 = vsel %vm361, %v360, %v353
    %v370 = vsel %vm288, %v369, 0.0
    %v371 = vsel %vm289, %v368, 0.0
    %v372 = vsel %vm290, %v367, 0.0
    %v373 = vsel %vm291, %v366, 0.0
    %v374 = vsel %vm292, %v365, 0.0
    %v375 = vsel %vm293, %v364, 0.0
    %v376 = vsel %vm294, %v363, 0.0
    %v377 = vsel %vm295, %v362, 0.0
    %386 = vrot.lane.b32.xlu0 %v370, 64
    %v387 = vpop.permute.xlu0 %386
    %388 = vrot.lane.b32.xlu0 %v371, 64
    %v389 = vpop.permute.xlu0 %388
    %390 = vrot.lane.b32.xlu0 %v372, 64
    %v391 = vpop.permute.xlu0 %390
    %392 = vrot.lane.b32.xlu0 %v373, 64
    %v393 = vpop.permute.xlu0 %392
    %394 = vrot.lane.b32.xlu0 %v374, 64
    %v395 = vpop.permute.xlu0 %394
    %396 = vrot.lane.b32.xlu0 %v375, 64
    %v397 = vpop.permute.xlu0 %396
    %398 = vrot.lane.b32.xlu0 %v376, 64
    %v399 = vpop.permute.xlu0 %398
    %400 = vrot.lane.b32.xlu0 %v377, 64
    %v401 = vpop.permute.xlu0 %400
    %418 = vrot.lane.b32.xlu0 %v145, 64
    %v419 = vpop.permute.xlu0 %418
    %420 = vrot.lane.b32.xlu0 %v150, 64
    %v421 = vpop.permute.xlu0 %420
    %422 = vrot.lane.b32.xlu0 %v155, 64
    %v423 = vpop.permute.xlu0 %422
    %424 = vrot.lane.b32.xlu0 %v160, 64
    %v425 = vpop.permute.xlu0 %424
    %426 = vrot.lane.b32.xlu0 %v165, 64
    %v427 = vpop.permute.xlu0 %426
    %428 = vrot.lane.b32.xlu0 %v170, 64
    %v429 = vpop.permute.xlu0 %428
    %430 = vrot.lane.b32.xlu0 %v175, 64
    %v431 = vpop.permute.xlu0 %430
    %432 = vrot.lane.b32.xlu0 %v180, 64
    %v433 = vpop.permute.xlu0 %432
    %vm442 = vcmask 523264
    %v443 = vsel %vm442, %v345, %v387
    %v444 = vsel %vm442, %v346, %v389
    %v445 = vsel %vm442, %v347, %v391
    %v446 = vsel %vm442, %v348, %v393
    %v447 = vsel %vm442, %v349, %v395
    %v448 = vsel %vm442, %v350, %v397
    %v449 = vsel %vm442, %v351, %v399
    %v450 = vsel %vm442, %v352, %v401
    %v451 = vsel %vm442, %v145, %v419
    %v452 = vsel %vm442, %v150, %v421
    %v453 = vsel %vm442, %v155, %v423
    %v454 = vsel %vm442, %v160, %v425
    %v455 = vsel %vm442, %v165, %v427
    %v456 = vsel %vm442, %v170, %v429
    %v457 = vsel %vm442, %v175, %v431
    %v458 = vsel %vm442, %v180, %v433
    %v459 = vld [vmem:[#allocation2] sm:$0xff]
    %v460 = vld [vmem:[#allocation2 + $0x8] sm:$0xff]
    %v461 = vld [vmem:[#allocation2 + $0x10] sm:$0xff]
    %v462 = vld [vmem:[#allocation2 + $0x18] sm:$0xff]
    %v463 = vld [vmem:[#allocation2 + $0x20] sm:$0xff]
    %v464 = vld [vmem:[#allocation2 + $0x28] sm:$0xff]
    %v465 = vld [vmem:[#allocation2 + $0x30] sm:$0xff]
    %v466 = vld [vmem:[#allocation2 + $0x38] sm:$0xff]
    %v467 = vld [vmem:[#allocation2 + $0x40] sm:$0xff]
    %v468 = vld [vmem:[#allocation2 + $0x48] sm:$0xff]
    %v469 = vld [vmem:[#allocation2 + $0x50] sm:$0xff]
    %v470 = vld [vmem:[#allocation2 + $0x58] sm:$0xff]
    %v471 = vld [vmem:[#allocation2 + $0x60] sm:$0xff]
    %v472 = vld [vmem:[#allocation2 + $0x68] sm:$0xff]
    %v473 = vld [vmem:[#allocation2 + $0x70] sm:$0xff]
    %v474 = vld [vmem:[#allocation2 + $0x78] sm:$0xff]
    %v475 = vld [vmem:[#allocation2 + $0x80] sm:$0xff]
    %v476 = vld [vmem:[#allocation2 + $0x88] sm:$0xff]
    %v477 = vld [vmem:[#allocation2 + $0x90] sm:$0xff]
    %v478 = vld [vmem:[#allocation2 + $0x98] sm:$0xff]
    %v479 = vld [vmem:[#allocation2 + $0xa0] sm:$0xff]
    %v480 = vld [vmem:[#allocation2 + $0xa8] sm:$0xff]
    %v481 = vld [vmem:[#allocation2 + $0xb0] sm:$0xff]
    %v482 = vld [vmem:[#allocation2 + $0xb8] sm:$0xff]
    %v483 = vld [vmem:[#allocation2 + $0xc0] sm:$0xff]
    %v484 = vld [vmem:[#allocation2 + $0xc8] sm:$0xff]
    %v485 = vld [vmem:[#allocation2 + $0xd0] sm:$0xff]
    %v486 = vld [vmem:[#allocation2 + $0xd8] sm:$0xff]
    %v487 = vld [vmem:[#allocation2 + $0xe0] sm:$0xff]
    %v488 = vld [vmem:[#allocation2 + $0xe8] sm:$0xff]
    %v489 = vld [vmem:[#allocation2 + $0xf0] sm:$0xff]
    %v490 = vld [vmem:[#allocation2 + $0xf8] sm:$0xff]
    %v491 = vld [vmem:[%s5] sm:$0x1]
    %v493 = vlaneseq
    %v494 = vshrl.u32 %v493, 7
    %v495 = vsub.s32 0, %v494
    %v496 = vrot.slane %v491, %v495
    %498 = vmatprep.subr.mxu0 0.0
    %499 = vmatpush1.msra.mxu0 %v474
    %500 = vmatprep.subr.mxu0 0.0
    %501 = vmatpush1.msra.mxu0 %v473
    %502 = vmatprep.subr.mxu0 0.0
    %503 = vmatpush1.msra.mxu0 %v472
    %504 = vmatprep.subr.mxu0 0.0
    %505 = vmatpush1.msra.mxu0 %v471
    %506 = vmatprep.subr.mxu0 0.0
    %507 = vmatpush1.msra.mxu0 %v470
    %508 = vmatprep.subr.mxu0 0.0
    %509 = vmatpush1.msra.mxu0 %v469
    %510 = vmatprep.subr.mxu0 0.0
    %511 = vmatpush1.msra.mxu0 %v468
    %512 = vmatprep.subr.mxu0 0.0
    %513 = vmatpush1.msra.mxu0 %v467
    %514 = vmatprep.subr.mxu0 0.0
    %515 = vmatpush1.msra.mxu0 %v466
    %516 = vmatprep.subr.mxu0 0.0
    %517 = vmatpush1.msra.mxu0 %v465
    %518 = vmatprep.subr.mxu0 0.0
    %519 = vmatpush1.msra.mxu0 %v464
    %520 = vmatprep.subr.mxu0 0.0
    %521 = vmatpush1.msra.mxu0 %v463
    %522 = vmatprep.subr.mxu0 0.0
    %523 = vmatpush1.msra.mxu0 %v462
    %524 = vmatprep.subr.mxu0 0.0
    %525 = vmatpush1.msra.mxu0 %v461
    %526 = vmatprep.subr.mxu0 0.0
    %527 = vmatpush1.msra.mxu0 %v460
    %528 = vmatprep.subr.mxu0 0.0
    %529 = vmatpush1.msra.mxu0 %v459
    %530 = vmatprep.subr.mxu0 0.0
    %531 = vmatpush2.msra.mxu0 %v490
    %532 = vmatprep.subr.mxu0 0.0
    %533 = vmatpush2.msra.mxu0 %v489
    %534 = vmatprep.subr.mxu0 0.0
    %535 = vmatpush2.msra.mxu0 %v488
    %536 = vmatprep.subr.mxu0 0.0
    %537 = vmatpush2.msra.mxu0 %v487
    %538 = vmatprep.subr.mxu0 0.0
    %539 = vmatpush2.msra.mxu0 %v486
    %540 = vmatprep.subr.mxu0 0.0
    %541 = vmatpush2.msra.mxu0 %v485
    %542 = vmatprep.subr.mxu0 0.0
    %543 = vmatpush2.msra.mxu0 %v484
    %544 = vmatprep.subr.mxu0 0.0
    %545 = vmatpush2.msra.mxu0 %v483
    %546 = vmatprep.subr.mxu0 0.0
    %547 = vmatpush2.msra.mxu0 %v482
    %548 = vmatprep.subr.mxu0 0.0
    %549 = vmatpush2.msra.mxu0 %v481
    %550 = vmatprep.subr.mxu0 0.0
    %551 = vmatpush2.msra.mxu0 %v480
    %552 = vmatprep.subr.mxu0 0.0
    %553 = vmatpush2.msra.mxu0 %v479
    %554 = vmatprep.subr.mxu0 0.0
    %555 = vmatpush2.msra.mxu0 %v478
    %556 = vmatprep.subr.mxu0 0.0
    %557 = vmatpush2.msra.mxu0 %v477
    %558 = vmatprep.subr.mxu0 0.0
    %559 = vmatpush2.msra.mxu0 %v476
    %560 = vmatprep.subr.mxu0 0.0
    %561 = vmatpush2.msra.mxu0 %v475
    %562 = vmatprep.mubr.f32.mxu0 %v451
    %563 = vmatmul.mubr.f32.gmra.mxu0 %v443
    %v564 = vpop.f32.mrf.mxu0
    %v565 = vadd.f32 %v496, %v564
    %v566 = vpop.f32.mrf.mxu0
    %567 = vmatprep.mubr.f32.mxu0 %v452
    %568 = vmatmul.mubr.f32.gmra.mxu0 %v444
    %v569 = vpop.f32.mrf.mxu0
    %v570 = vadd.f32 %v496, %v569
    %v571 = vpop.f32.mrf.mxu0
    %572 = vmatprep.mubr.f32.mxu0 %v453
    %573 = vmatmul.mubr.f32.gmra.mxu0 %v445
    %v574 = vpop.f32.mrf.mxu0
    %v575 = vadd.f32 %v496, %v574
    %v576 = vpop.f32.mrf.mxu0
    %577 = vmatprep.mubr.f32.mxu0 %v454
    %578 = vmatmul.mubr.f32.gmra.mxu0 %v446
    %v579 = vpop.f32.mrf.mxu0
    %v580 = vadd.f32 %v496, %v579
    %v581 = vpop.f32.mrf.mxu0
    %582 = vmatprep.mubr.f32.mxu0 %v455
    %583 = vmatmul.mubr.f32.gmra.mxu0 %v447
    %v584 = vpop.f32.mrf.mxu0
    %v585 = vadd.f32 %v496, %v584
    %v586 = vpop.f32.mrf.mxu0
    %587 = vmatprep.mubr.f32.mxu0 %v456
    %588 = vmatmul.mubr.f32.gmra.mxu0 %v448
    %v589 = vpop.f32.mrf.mxu0
    %v590 = vadd.f32 %v496, %v589
    %v591 = vpop.f32.mrf.mxu0
    %592 = vmatprep.mubr.f32.mxu0 %v457
    %593 = vmatmul.mubr.f32.gmra.mxu0 %v449
    %v594 = vpop.f32.mrf.mxu0
    %v595 = vadd.f32 %v496, %v594
    %v596 = vpop.f32.mrf.mxu0
    %597 = vmatprep.mubr.f32.mxu0 %v458
    %598 = vmatmul.mubr.f32.gmra.mxu0 %v450
    %v599 = vpop.f32.mrf.mxu0
    %v600 = vadd.f32 %v496, %v599
    %v601 = vpop.f32.mrf.mxu0
    %602 = vdwg.mxu0
    %v603 = vmax.f32 %v565, 0.0
    %v604 = vmax.f32 %v570, 0.0
    %v605 = vmax.f32 %v575, 0.0
    %v606 = vmax.f32 %v580, 0.0
    %v607 = vmax.f32 %v585, 0.0
    %v608 = vmax.f32 %v590, 0.0
    %v609 = vmax.f32 %v595, 0.0
    %v610 = vmax.f32 %v600, 0.0
    %619 = vrot.lane.b32.xlu0 %v565, 64
    %v620 = vpop.permute.xlu0 %619
    %621 = vrot.lane.b32.xlu0 %v570, 64
    %v622 = vpop.permute.xlu0 %621
    %623 = vrot.lane.b32.xlu0 %v575, 64
    %v624 = vpop.permute.xlu0 %623
    %625 = vrot.lane.b32.xlu0 %v580, 64
    %v626 = vpop.permute.xlu0 %625
    %627 = vrot.lane.b32.xlu0 %v585, 64
    %v628 = vpop.permute.xlu0 %627
    %629 = vrot.lane.b32.xlu0 %v590, 64
    %v630 = vpop.permute.xlu0 %629
    %631 = vrot.lane.b32.xlu0 %v595, 64
    %v632 = vpop.permute.xlu0 %631
    %633 = vrot.lane.b32.xlu0 %v600, 64
    %v634 = vpop.permute.xlu0 %633
    %v643 = vadd.f32 %v603, %v620
    %v644 = vadd.f32 %v604, %v622
    %v645 = vadd.f32 %v605, %v624
    %v646 = vadd.f32 %v606, %v626
    %v647 = vadd.f32 %v607, %v628
    %v648 = vadd.f32 %v608, %v630
    %v649 = vadd.f32 %v609, %v632
    %v650 = vadd.f32 %v610, %v634
    %v651 = vmax.f32 %v643, 0.0
    %v652 = vmax.f32 %v644, 0.0
    %v653 = vmax.f32 %v645, 0.0
    %v654 = vmax.f32 %v646, 0.0
    %v655 = vmax.f32 %v647, 0.0
    %v656 = vmax.f32 %v648, 0.0
    %v657 = vmax.f32 %v649, 0.0
    %v658 = vmax.f32 %v650, 0.0
    %v659 = vrot.slane %v651, 4
    %v660 = vrot.slane %v652, 4
    %v661 = vrot.slane %v653, 4
    %v662 = vrot.slane %v654, 4
    %v663 = vrot.slane %v655, 4
    %v664 = vrot.slane %v656, 4
    %v665 = vrot.slane %v657, 4
    %v666 = vrot.slane %v658, 4
    %vm667 = vcmp.lt.s32.totalorder %v184, 4
    %v668 = vsel %vm667, %v665, %v666
    %v669 = vsel %vm667, %v664, %v665
    %v670 = vsel %vm667, %v663, %v664
    %v671 = vsel %vm667, %v662, %v663
    %v672 = vsel %vm667, %v661, %v662
    %v673 = vsel %vm667, %v660, %v661
    %v674 = vsel %vm667, %v659, %v660
    %v675 = vsel %vm667, %v666, %v659
    %v676 = vsel %vm304, %v675, 0.0
    %v677 = vsel %vm305, %v674, 0.0
    %v678 = vsel %vm306, %v673, 0.0
    %v679 = vsel %vm307, %v672, 0.0
    %v680 = vsel %vm308, %v671, 0.0
    %v681 = vsel %vm309, %v670, 0.0
    %v682 = vsel %vm310, %v669, 0.0
    %v683 = vsel %vm311, %v668, 0.0
    %v684 = vrot.slane %v651, 6
    %v685 = vrot.slane %v652, 6
    %v686 = vrot.slane %v653, 6
    %v687 = vrot.slane %v654, 6
    %v688 = vrot.slane %v655, 6
    %v689 = vrot.slane %v656, 6
    %v690 = vrot.slane %v657, 6
    %v691 = vrot.slane %v658, 6
    %v692 = vsel %vm336, %v690, %v691
    %v693 = vsel %vm336, %v689, %v690
    %v694 = vsel %vm336, %v688, %v689
    %v695 = vsel %vm336, %v687, %v688
    %v696 = vsel %vm336, %v686, %v687
    %v697 = vsel %vm336, %v685, %v686
    %v698 = vsel %vm336, %v684, %v685
    %v699 = vsel %vm336, %v691, %v684
    %v700 = vsel %vm296, %v699, 0.0
    %v701 = vsel %vm297, %v698, 0.0
    %v702 = vsel %vm298, %v697, 0.0
    %v703 = vsel %vm299, %v696, 0.0
    %v704 = vsel %vm300, %v695, 0.0
    %v705 = vsel %vm301, %v694, 0.0
    %v706 = vsel %vm302, %v693, 0.0
    %v707 = vsel %vm303, %v692, 0.0
    %716 = vrot.lane.b32.xlu0 %v700, 64
    %v717 = vpop.permute.xlu0 %716
    %718 = vrot.lane.b32.xlu0 %v701, 64
    %v719 = vpop.permute.xlu0 %718
    %720 = vrot.lane.b32.xlu0 %v702, 64
    %v721 = vpop.permute.xlu0 %720
    %722 = vrot.lane.b32.xlu0 %v703, 64
    %v723 = vpop.permute.xlu0 %722
    %724 = vrot.lane.b32.xlu0 %v704, 64
    %v725 = vpop.permute.xlu0 %724
    %726 = vrot.lane.b32.xlu0 %v705, 64
    %v727 = vpop.permute.xlu0 %726
    %728 = vrot.lane.b32.xlu0 %v706, 64
    %v729 = vpop.permute.xlu0 %728
    %730 = vrot.lane.b32.xlu0 %v707, 64
    %v731 = vpop.permute.xlu0 %730
    %748 = vrot.lane.b32.xlu0 %v651, 64
    %v749 = vpop.permute.xlu0 %748
    %750 = vrot.lane.b32.xlu0 %v652, 64
    %v751 = vpop.permute.xlu0 %750
    %752 = vrot.lane.b32.xlu0 %v653, 64
    %v753 = vpop.permute.xlu0 %752
    %754 = vrot.lane.b32.xlu0 %v654, 64
    %v755 = vpop.permute.xlu0 %754
    %756 = vrot.lane.b32.xlu0 %v655, 64
    %v757 = vpop.permute.xlu0 %756
    %758 = vrot.lane.b32.xlu0 %v656, 64
    %v759 = vpop.permute.xlu0 %758
    %760 = vrot.lane.b32.xlu0 %v657, 64
    %v761 = vpop.permute.xlu0 %760
    %762 = vrot.lane.b32.xlu0 %v658, 64
    %v763 = vpop.permute.xlu0 %762
    %v772 = vsel %vm442, %v676, %v717
    %v773 = vsel %vm442, %v677, %v719
    %v774 = vsel %vm442, %v678, %v721
    %v775 = vsel %vm442, %v679, %v723
    %v776 = vsel %vm442, %v680, %v725
    %v777 = vsel %vm442, %v681, %v727
    %v778 = vsel %vm442, %v682, %v729
    %v779 = vsel %vm442, %v683, %v731
    %v780 = vsel %vm442, %v651, %v749
    %v781 = vsel %vm442, %v652, %v751
    %v782 = vsel %vm442, %v653, %v753
    %v783 = vsel %vm442, %v654, %v755
    %v784 = vsel %vm442, %v655, %v757
    %v785 = vsel %vm442, %v656, %v759
    %v786 = vsel %vm442, %v657, %v761
    %v787 = vsel %vm442, %v658, %v763
    %s788 = scalar_lea.vmem [#allocation2], 256
    %v789 = vld [vmem:[%s788] sm:$0xff]
    %v790 = vld [vmem:[%s788 + $0x8] sm:$0xff]
    %v791 = vld [vmem:[%s788 + $0x10] sm:$0xff]
    %v792 = vld [vmem:[%s788 + $0x18] sm:$0xff]
    %v793 = vld [vmem:[%s788 + $0x20] sm:$0xff]
    %v794 = vld [vmem:[%s788 + $0x28] sm:$0xff]
    %v795 = vld [vmem:[%s788 + $0x30] sm:$0xff]
    %v796 = vld [vmem:[%s788 + $0x38] sm:$0xff]
    %v797 = vld [vmem:[%s788 + $0x40] sm:$0xff]
    %v798 = vld [vmem:[%s788 + $0x48] sm:$0xff]
    %v799 = vld [vmem:[%s788 + $0x50] sm:$0xff]
    %v800 = vld [vmem:[%s788 + $0x58] sm:$0xff]
    %v801 = vld [vmem:[%s788 + $0x60] sm:$0xff]
    %v802 = vld [vmem:[%s788 + $0x68] sm:$0xff]
    %v803 = vld [vmem:[%s788 + $0x70] sm:$0xff]
    %v804 = vld [vmem:[%s788 + $0x78] sm:$0xff]
    %v805 = vld [vmem:[%s788 + $0x80] sm:$0xff]
    %v806 = vld [vmem:[%s788 + $0x88] sm:$0xff]
    %v807 = vld [vmem:[%s788 + $0x90] sm:$0xff]
    %v808 = vld [vmem:[%s788 + $0x98] sm:$0xff]
    %v809 = vld [vmem:[%s788 + $0xa0] sm:$0xff]
    %v810 = vld [vmem:[%s788 + $0xa8] sm:$0xff]
    %v811 = vld [vmem:[%s788 + $0xb0] sm:$0xff]
    %v812 = vld [vmem:[%s788 + $0xb8] sm:$0xff]
    %v813 = vld [vmem:[%s788 + $0xc0] sm:$0xff]
    %v814 = vld [vmem:[%s788 + $0xc8] sm:$0xff]
    %v815 = vld [vmem:[%s788 + $0xd0] sm:$0xff]
    %v816 = vld [vmem:[%s788 + $0xd8] sm:$0xff]
    %v817 = vld [vmem:[%s788 + $0xe0] sm:$0xff]
    %v818 = vld [vmem:[%s788 + $0xe8] sm:$0xff]
    %v819 = vld [vmem:[%s788 + $0xf0] sm:$0xff]
    %v820 = vld [vmem:[%s788 + $0xf8] sm:$0xff]
    %s821 = scalar_lea.vmem %s5, 1
    %v822 = vld [vmem:[%s821] sm:$0x1]
    %v824 = vlaneseq
    %v825 = vshrl.u32 %v824, 7
    %v826 = vsub.s32 0, %v825
    %v827 = vrot.slane %v822, %v826
    %829 = vmatprep.subr.mxu0 0.0
    %830 = vmatpush1.msra.mxu0 %v804
    %831 = vmatprep.subr.mxu0 0.0
    %832 = vmatpush1.msra.mxu0 %v803
    %833 = vmatprep.subr.mxu0 0.0
    %834 = vmatpush1.msra.mxu0 %v802
    %835 = vmatprep.subr.mxu0 0.0
    %836 = vmatpush1.msra.mxu0 %v801
    %837 = vmatprep.subr.mxu0 0.0
    %838 = vmatpush1.msra.mxu0 %v800
    %839 = vmatprep.subr.mxu0 0.0
    %840 = vmatpush1.msra.mxu0 %v799
    %841 = vmatprep.subr.mxu0 0.0
    %842 = vmatpush1.msra.mxu0 %v798
    %843 = vmatprep.subr.mxu0 0.0
    %844 = vmatpush1.msra.mxu0 %v797
    %845 = vmatprep.subr.mxu0 0.0
    %846 = vmatpush1.msra.mxu0 %v796
    %847 = vmatprep.subr.mxu0 0.0
    %848 = vmatpush1.msra.mxu0 %v795
    %849 = vmatprep.subr.mxu0 0.0
    %850 = vmatpush1.msra.mxu0 %v794
    %851 = vmatprep.subr.mxu0 0.0
    %852 = vmatpush1.msra.mxu0 %v793
    %853 = vmatprep.subr.mxu0 0.0
    %854 = vmatpush1.msra.mxu0 %v792
    %855 = vmatprep.subr.mxu0 0.0
    %856 = vmatpush1.msra.mxu0 %v791
    %857 = vmatprep.subr.mxu0 0.0
    %858 = vmatpush1.msra.mxu0 %v790
    %859 = vmatprep.subr.mxu0 0.0
    %860 = vmatpush1.msra.mxu0 %v789
    %861 = vmatprep.subr.mxu0 0.0
    %862 = vmatpush2.msra.mxu0 %v820
    %863 = vmatprep.subr.mxu0 0.0
    %864 = vmatpush2.msra.mxu0 %v819
    %865 = vmatprep.subr.mxu0 0.0
    %866 = vmatpush2.msra.mxu0 %v818
    %867 = vmatprep.subr.mxu0 0.0
    %868 = vmatpush2.msra.mxu0 %v817
    %869 = vmatprep.subr.mxu0 0.0
    %870 = vmatpush2.msra.mxu0 %v816
    %871 = vmatprep.subr.mxu0 0.0
    %872 = vmatpush2.msra.mxu0 %v815
    %873 = vmatprep.subr.mxu0 0.0
    %874 = vmatpush2.msra.mxu0 %v814
    %875 = vmatprep.subr.mxu0 0.0
    %876 = vmatpush2.msra.mxu0 %v813
    %877 = vmatprep.subr.mxu0 0.0
    %878 = vmatpush2.msra.mxu0 %v812
    %879 = vmatprep.subr.mxu0 0.0
    %880 = vmatpush2.msra.mxu0 %v811
    %881 = vmatprep.subr.mxu0 0.0
    %882 = vmatpush2.msra.mxu0 %v810
    %883 = vmatprep.subr.mxu0 0.0
    %884 = vmatpush2.msra.mxu0 %v809
    %885 = vmatprep.subr.mxu0 0.0
    %886 = vmatpush2.msra.mxu0 %v808
    %887 = vmatprep.subr.mxu0 0.0
    %888 = vmatpush2.msra.mxu0 %v807
    %889 = vmatprep.subr.mxu0 0.0
    %890 = vmatpush2.msra.mxu0 %v806
    %891 = vmatprep.subr.mxu0 0.0
    %892 = vmatpush2.msra.mxu0 %v805
    %893 = vmatprep.mubr.f32.mxu0 %v780
    %894 = vmatmul.mubr.f32.gmra.mxu0 %v772
    %v895 = vpop.f32.mrf.mxu0
    %v896 = vadd.f32 %v827, %v895
    %v897 = vpop.f32.mrf.mxu0
    %898 = vmatprep.mubr.f32.mxu0 %v781
    %899 = vmatmul.mubr.f32.gmra.mxu0 %v773
    %v900 = vpop.f32.mrf.mxu0
    %v901 = vadd.f32 %v827, %v900
    %v902 = vpop.f32.mrf.mxu0
    %903 = vmatprep.mubr.f32.mxu0 %v782
    %904 = vmatmul.mubr.f32.gmra.mxu0 %v774
    %v905 = vpop.f32.mrf.mxu0
    %v906 = vadd.f32 %v827, %v905
    %v907 = vpop.f32.mrf.mxu0
    %908 = vmatprep.mubr.f32.mxu0 %v783
    %909 = vmatmul.mubr.f32.gmra.mxu0 %v775
    %v910 = vpop.f32.mrf.mxu0
    %v911 = vadd.f32 %v827, %v910
    %v912 = vpop.f32.mrf.mxu0
    %913 = vmatprep.mubr.f32.mxu0 %v784
    %914 = vmatmul.mubr.f32.gmra.mxu0 %v776
    %v915 = vpop.f32.mrf.mxu0
    %v916 = vadd.f32 %v827, %v915
    %v917 = vpop.f32.mrf.mxu0
    %918 = vmatprep.mubr.f32.mxu0 %v785
    %919 = vmatmul.mubr.f32.gmra.mxu0 %v777
    %v920 = vpop.f32.mrf.mxu0
    %v921 = vadd.f32 %v827, %v920
    %v922 = vpop.f32.mrf.mxu0
    %923 = vmatprep.mubr.f32.mxu0 %v786
    %924 = vmatmul.mubr.f32.gmra.mxu0 %v778
    %v925 = vpop.f32.mrf.mxu0
    %v926 = vadd.f32 %v827, %v925
    %v927 = vpop.f32.mrf.mxu0
    %928 = vmatprep.mubr.f32.mxu0 %v787
    %929 = vmatmul.mubr.f32.gmra.mxu0 %v779
    %v930 = vpop.f32.mrf.mxu0
    %v931 = vadd.f32 %v827, %v930
    %v932 = vpop.f32.mrf.mxu0
    %933 = vdwg.mxu0
    %v934 = vmax.f32 %v896, 0.0
    %v935 = vmax.f32 %v901, 0.0
    %v936 = vmax.f32 %v906, 0.0
    %v937 = vmax.f32 %v911, 0.0
    %v938 = vmax.f32 %v916, 0.0
    %v939 = vmax.f32 %v921, 0.0
    %v940 = vmax.f32 %v926, 0.0
    %v941 = vmax.f32 %v931, 0.0
    %950 = vrot.lane.b32.xlu0 %v896, 64
    %v951 = vpop.permute.xlu0 %950
    %952 = vrot.lane.b32.xlu0 %v901, 64
    %v953 = vpop.permute.xlu0 %952
    %954 = vrot.lane.b32.xlu0 %v906, 64
    %v955 = vpop.permute.xlu0 %954
    %956 = vrot.lane.b32.xlu0 %v911, 64
    %v957 = vpop.permute.xlu0 %956
    %958 = vrot.lane.b32.xlu0 %v916, 64
    %v959 = vpop.permute.xlu0 %958
    %960 = vrot.lane.b32.xlu0 %v921, 64
    %v961 = vpop.permute.xlu0 %960
    %962 = vrot.lane.b32.xlu0 %v926, 64
    %v963 = vpop.permute.xlu0 %962
    %964 = vrot.lane.b32.xlu0 %v931, 64
    %v965 = vpop.permute.xlu0 %964
    %v974 = vadd.f32 %v934, %v951
    %v975 = vadd.f32 %v935, %v953
    %v976 = vadd.f32 %v936, %v955
    %v977 = vadd.f32 %v937, %v957
    %v978 = vadd.f32 %v938, %v959
    %v979 = vadd.f32 %v939, %v961
    %v980 = vadd.f32 %v940, %v963
    %v981 = vadd.f32 %v941, %v965
    %v982 = vmax.f32 %v974, 0.0
    %v983 = vmax.f32 %v975, 0.0
    %v984 = vmax.f32 %v976, 0.0
    %v985 = vmax.f32 %v977, 0.0
    %v986 = vmax.f32 %v978, 0.0
    %v987 = vmax.f32 %v979, 0.0
    %v988 = vmax.f32 %v980, 0.0
    %v989 = vmax.f32 %v981, 0.0
    %v990 = vsel %vm312, %v989, 0.0
    %v991 = vsel %vm313, %v982, 0.0
    %v992 = vsel %vm314, %v983, 0.0
    %v993 = vsel %vm315, %v984, 0.0
    %v994 = vsel %vm316, %v985, 0.0
    %v995 = vsel %vm317, %v986, 0.0
    %v996 = vsel %vm318, %v987, 0.0
    %v997 = vsel %vm319, %v988, 0.0
    %v998 = vrot.slane %v982, 4
    %v999 = vrot.slane %v983, 4
    %v1000 = vrot.slane %v984, 4
    %v1001 = vrot.slane %v985, 4
    %v1002 = vrot.slane %v986, 4
    %v1003 = vrot.slane %v987, 4
    %v1004 = vrot.slane %v988, 4
    %v1005 = vrot.slane %v989, 4
    %v1006 = vsel %vm667, %v1004, %v1005
    %v1007 = vsel %vm667, %v1003, %v1004
    %v1008 = vsel %vm667, %v1002, %v1003
    %v1009 = vsel %vm667, %v1001, %v1002
    %v1010 = vsel %vm667, %v1000, %v1001
    %v1011 = vsel %vm667, %v999, %v1000
    %v1012 = vsel %vm667, %v998, %v999
    %v1013 = vsel %vm667, %v1005, %v998
    %v1014 = vsel %vm304, %v1013, 0.0
    %v1015 = vsel %vm305, %v1012, 0.0
    %v1016 = vsel %vm306, %v1011, 0.0
    %v1017 = vsel %vm307, %v1010, 0.0
    %v1018 = vsel %vm308, %v1009, 0.0
    %v1019 = vsel %vm309, %v1008, 0.0
    %v1020 = vsel %vm310, %v1007, 0.0
    %v1021 = vsel %vm311, %v1006, 0.0
    %1030 = vrot.lane.b32.xlu0 %v1014, 64
    %v1031 = vpop.permute.xlu0 %1030
    %1032 = vrot.lane.b32.xlu0 %v1015, 64
    %v1033 = vpop.permute.xlu0 %1032
    %1034 = vrot.lane.b32.xlu0 %v1016, 64
    %v1035 = vpop.permute.xlu0 %1034
    %1036 = vrot.lane.b32.xlu0 %v1017, 64
    %v1037 = vpop.permute.xlu0 %1036
    %1038 = vrot.lane.b32.xlu0 %v1018, 64
    %v1039 = vpop.permute.xlu0 %1038
    %1040 = vrot.lane.b32.xlu0 %v1019, 64
    %v1041 = vpop.permute.xlu0 %1040
    %1042 = vrot.lane.b32.xlu0 %v1020, 64
    %v1043 = vpop.permute.xlu0 %1042
    %1044 = vrot.lane.b32.xlu0 %v1021, 64
    %v1045 = vpop.permute.xlu0 %1044
    %1062 = vrot.lane.b32.xlu0 %v982, 64
    %v1063 = vpop.permute.xlu0 %1062
    %1064 = vrot.lane.b32.xlu0 %v983, 64
    %v1065 = vpop.permute.xlu0 %1064
    %1066 = vrot.lane.b32.xlu0 %v984, 64
    %v1067 = vpop.permute.xlu0 %1066
    %1068 = vrot.lane.b32.xlu0 %v985, 64
    %v1069 = vpop.permute.xlu0 %1068
    %1070 = vrot.lane.b32.xlu0 %v986, 64
    %v1071 = vpop.permute.xlu0 %1070
    %1072 = vrot.lane.b32.xlu0 %v987, 64
    %v1073 = vpop.permute.xlu0 %1072
    %1074 = vrot.lane.b32.xlu0 %v988, 64
    %v1075 = vpop.permute.xlu0 %1074
    %1076 = vrot.lane.b32.xlu0 %v989, 64
    %v1077 = vpop.permute.xlu0 %1076
    %v1086 = vsel %vm442, %v990, %v1031
    %v1087 = vsel %vm442, %v991, %v1033
    %v1088 = vsel %vm442, %v992, %v1035
    %v1089 = vsel %vm442, %v993, %v1037
    %v1090 = vsel %vm442, %v994, %v1039
    %v1091 = vsel %vm442, %v995, %v1041
    %v1092 = vsel %vm442, %v996, %v1043
    %v1093 = vsel %vm442, %v997, %v1045
    %v1094 = vsel %vm442, %v982, %v1063
    %v1095 = vsel %vm442, %v983, %v1065
    %v1096 = vsel %vm442, %v984, %v1067
    %v1097 = vsel %vm442, %v985, %v1069
    %v1098 = vsel %vm442, %v986, %v1071
    %v1099 = vsel %vm442, %v987, %v1073
    %v1100 = vsel %vm442, %v988, %v1075
    %v1101 = vsel %vm442, %v989, %v1077
    %s1102 = scalar_lea.vmem [#allocation2], 512
    %v1103 = vld [vmem:[%s1102] sm:$0xff]
    %v1104 = vld [vmem:[%s1102 + $0x8] sm:$0xff]
    %v1105 = vld [vmem:[%s1102 + $0x10] sm:$0xff]
    %v1106 = vld [vmem:[%s1102 + $0x18] sm:$0xff]
    %v1107 = vld [vmem:[%s1102 + $0x20] sm:$0xff]
    %v1108 = vld [vmem:[%s1102 + $0x28] sm:$0xff]
    %v1109 = vld [vmem:[%s1102 + $0x30] sm:$0xff]
    %v1110 = vld [vmem:[%s1102 + $0x38] sm:$0xff]
    %v1111 = vld [vmem:[%s1102 + $0x40] sm:$0xff]
    %v1112 = vld [vmem:[%s1102 + $0x48] sm:$0xff]
    %v1113 = vld [vmem:[%s1102 + $0x50] sm:$0xff]
    %v1114 = vld [vmem:[%s1102 + $0x58] sm:$0xff]
    %v1115 = vld [vmem:[%s1102 + $0x60] sm:$0xff]
    %v1116 = vld [vmem:[%s1102 + $0x68] sm:$0xff]
    %v1117 = vld [vmem:[%s1102 + $0x70] sm:$0xff]
    %v1118 = vld [vmem:[%s1102 + $0x78] sm:$0xff]
    %v1119 = vld [vmem:[%s1102 + $0x80] sm:$0xff]
    %v1120 = vld [vmem:[%s1102 + $0x88] sm:$0xff]
    %v1121 = vld [vmem:[%s1102 + $0x90] sm:$0xff]
    %v1122 = vld [vmem:[%s1102 + $0x98] sm:$0xff]
    %v1123 = vld [vmem:[%s1102 + $0xa0] sm:$0xff]
    %v1124 = vld [vmem:[%s1102 + $0xa8] sm:$0xff]
    %v1125 = vld [vmem:[%s1102 + $0xb0] sm:$0xff]
    %v1126 = vld [vmem:[%s1102 + $0xb8] sm:$0xff]
    %v1127 = vld [vmem:[%s1102 + $0xc0] sm:$0xff]
    %v1128 = vld [vmem:[%s1102 + $0xc8] sm:$0xff]
    %v1129 = vld [vmem:[%s1102 + $0xd0] sm:$0xff]
    %v1130 = vld [vmem:[%s1102 + $0xd8] sm:$0xff]
    %v1131 = vld [vmem:[%s1102 + $0xe0] sm:$0xff]
    %v1132 = vld [vmem:[%s1102 + $0xe8] sm:$0xff]
    %v1133 = vld [vmem:[%s1102 + $0xf0] sm:$0xff]
    %v1134 = vld [vmem:[%s1102 + $0xf8] sm:$0xff]
    %s1135 = scalar_lea.vmem %s5, 2
    %v1136 = vld [vmem:[%s1135] sm:$0x1]
    %v1138 = vlaneseq
    %v1139 = vshrl.u32 %v1138, 7
    %v1140 = vsub.s32 0, %v1139
    %v1141 = vrot.slane %v1136, %v1140
    %1143 = vmatprep.subr.mxu0 0.0
    %1144 = vmatpush1.msra.mxu0 %v1118
    %1145 = vmatprep.subr.mxu0 0.0
    %1146 = vmatpush1.msra.mxu0 %v1117
    %1147 = vmatprep.subr.mxu0 0.0
    %1148 = vmatpush1.msra.mxu0 %v1116
    %1149 = vmatprep.subr.mxu0 0.0
    %1150 = vmatpush1.msra.mxu0 %v1115
    %1151 = vmatprep.subr.mxu0 0.0
    %1152 = vmatpush1.msra.mxu0 %v1114
    %1153 = vmatprep.subr.mxu0 0.0
    %1154 = vmatpush1.msra.mxu0 %v1113
    %1155 = vmatprep.subr.mxu0 0.0
    %1156 = vmatpush1.msra.mxu0 %v1112
    %1157 = vmatprep.subr.mxu0 0.0
    %1158 = vmatpush1.msra.mxu0 %v1111
    %1159 = vmatprep.subr.mxu0 0.0
    %1160 = vmatpush1.msra.mxu0 %v1110
    %1161 = vmatprep.subr.mxu0 0.0
    %1162 = vmatpush1.msra.mxu0 %v1109
    %1163 = vmatprep.subr.mxu0 0.0
    %1164 = vmatpush1.msra.mxu0 %v1108
    %1165 = vmatprep.subr.mxu0 0.0
    %1166 = vmatpush1.msra.mxu0 %v1107
    %1167 = vmatprep.subr.mxu0 0.0
    %1168 = vmatpush1.msra.mxu0 %v1106
    %1169 = vmatprep.subr.mxu0 0.0
    %1170 = vmatpush1.msra.mxu0 %v1105
    %1171 = vmatprep.subr.mxu0 0.0
    %1172 = vmatpush1.msra.mxu0 %v1104
    %1173 = vmatprep.subr.mxu0 0.0
    %1174 = vmatpush1.msra.mxu0 %v1103
    %1175 = vmatprep.subr.mxu0 0.0
    %1176 = vmatpush2.msra.mxu0 %v1134
    %1177 = vmatprep.subr.mxu0 0.0
    %1178 = vmatpush2.msra.mxu0 %v1133
    %1179 = vmatprep.subr.mxu0 0.0
    %1180 = vmatpush2.msra.mxu0 %v1132
    %1181 = vmatprep.subr.mxu0 0.0
    %1182 = vmatpush2.msra.mxu0 %v1131
    %1183 = vmatprep.subr.mxu0 0.0
    %1184 = vmatpush2.msra.mxu0 %v1130
    %1185 = vmatprep.subr.mxu0 0.0
    %1186 = vmatpush2.msra.mxu0 %v1129
    %1187 = vmatprep.subr.mxu0 0.0
    %1188 = vmatpush2.msra.mxu0 %v1128
    %1189 = vmatprep.subr.mxu0 0.0
    %1190 = vmatpush2.msra.mxu0 %v1127
    %1191 = vmatprep.subr.mxu0 0.0
    %1192 = vmatpush2.msra.mxu0 %v1126
    %1193 = vmatprep.subr.mxu0 0.0
    %1194 = vmatpush2.msra.mxu0 %v1125
    %1195 = vmatprep.subr.mxu0 0.0
    %1196 = vmatpush2.msra.mxu0 %v1124
    %1197 = vmatprep.subr.mxu0 0.0
    %1198 = vmatpush2.msra.mxu0 %v1123
    %1199 = vmatprep.subr.mxu0 0.0
    %1200 = vmatpush2.msra.mxu0 %v1122
    %1201 = vmatprep.subr.mxu0 0.0
    %1202 = vmatpush2.msra.mxu0 %v1121
    %1203 = vmatprep.subr.mxu0 0.0
    %1204 = vmatpush2.msra.mxu0 %v1120
    %1205 = vmatprep.subr.mxu0 0.0
    %1206 = vmatpush2.msra.mxu0 %v1119
    %1207 = vmatprep.mubr.f32.mxu0 %v1094
    %1208 = vmatmul.mubr.f32.gmra.mxu0 %v1086
    %v1209 = vpop.f32.mrf.mxu0
    %v1210 = vadd.f32 %v1141, %v1209
    %v1211 = vpop.f32.mrf.mxu0
    %1212 = vmatprep.mubr.f32.mxu0 %v1095
    %1213 = vmatmul.mubr.f32.gmra.mxu0 %v1087
    %v1214 = vpop.f32.mrf.mxu0
    %v1215 = vadd.f32 %v1141, %v1214
    %v1216 = vpop.f32.mrf.mxu0
    %1217 = vmatprep.mubr.f32.mxu0 %v1096
    %1218 = vmatmul.mubr.f32.gmra.mxu0 %v1088
    %v1219 = vpop.f32.mrf.mxu0
    %v1220 = vadd.f32 %v1141, %v1219
    %v1221 = vpop.f32.mrf.mxu0
    %1222 = vmatprep.mubr.f32.mxu0 %v1097
    %1223 = vmatmul.mubr.f32.gmra.mxu0 %v1089
    %v1224 = vpop.f32.mrf.mxu0
    %v1225 = vadd.f32 %v1141, %v1224
    %v1226 = vpop.f32.mrf.mxu0
    %1227 = vmatprep.mubr.f32.mxu0 %v1098
    %1228 = vmatmul.mubr.f32.gmra.mxu0 %v1090
    %v1229 = vpop.f32.mrf.mxu0
    %v1230 = vadd.f32 %v1141, %v1229
    %v1231 = vpop.f32.mrf.mxu0
    %1232 = vmatprep.mubr.f32.mxu0 %v1099
    %1233 = vmatmul.mubr.f32.gmra.mxu0 %v1091
    %v1234 = vpop.f32.mrf.mxu0
    %v1235 = vadd.f32 %v1141, %v1234
    %v1236 = vpop.f32.mrf.mxu0
    %1237 = vmatprep.mubr.f32.mxu0 %v1100
    %1238 = vmatmul.mubr.f32.gmra.mxu0 %v1092
    %v1239 = vpop.f32.mrf.mxu0
    %v1240 = vadd.f32 %v1141, %v1239
    %v1241 = vpop.f32.mrf.mxu0
    %1242 = vmatprep.mubr.f32.mxu0 %v1101
    %1243 = vmatmul.mubr.f32.gmra.mxu0 %v1093
    %v1244 = vpop.f32.mrf.mxu0
    %v1245 = vadd.f32 %v1141, %v1244
    %v1246 = vpop.f32.mrf.mxu0
    %1247 = vdwg.mxu0
    %v1248 = vmax.f32 %v1210, 0.0
    %v1249 = vmax.f32 %v1215, 0.0
    %v1250 = vmax.f32 %v1220, 0.0
    %v1251 = vmax.f32 %v1225, 0.0
    %v1252 = vmax.f32 %v1230, 0.0
    %v1253 = vmax.f32 %v1235, 0.0
    %v1254 = vmax.f32 %v1240, 0.0
    %v1255 = vmax.f32 %v1245, 0.0
    %1264 = vrot.lane.b32.xlu0 %v1210, 64
    %v1265 = vpop.permute.xlu0 %1264
    %1266 = vrot.lane.b32.xlu0 %v1215, 64
    %v1267 = vpop.permute.xlu0 %1266
    %1268 = vrot.lane.b32.xlu0 %v1220, 64
    %v1269 = vpop.permute.xlu0 %1268
    %1270 = vrot.lane.b32.xlu0 %v1225, 64
    %v1271 = vpop.permute.xlu0 %1270
    %1272 = vrot.lane.b32.xlu0 %v1230, 64
    %v1273 = vpop.permute.xlu0 %1272
    %1274 = vrot.lane.b32.xlu0 %v1235, 64
    %v1275 = vpop.permute.xlu0 %1274
    %1276 = vrot.lane.b32.xlu0 %v1240, 64
    %v1277 = vpop.permute.xlu0 %1276
    %1278 = vrot.lane.b32.xlu0 %v1245, 64
    %v1279 = vpop.permute.xlu0 %1278
    %v1288 = vadd.f32 %v1248, %v1265
    %v1289 = vadd.f32 %v1249, %v1267
    %v1290 = vadd.f32 %v1250, %v1269
    %v1291 = vadd.f32 %v1251, %v1271
    %v1292 = vadd.f32 %v1252, %v1273
    %v1293 = vadd.f32 %v1253, %v1275
    %v1294 = vadd.f32 %v1254, %v1277
    %v1295 = vadd.f32 %v1255, %v1279
    %v1296 = vmax.f32 %v1288, 0.0
    %v1297 = vmax.f32 %v1289, 0.0
    %v1298 = vmax.f32 %v1290, 0.0
    %v1299 = vmax.f32 %v1291, 0.0
    %v1300 = vmax.f32 %v1292, 0.0
    %v1301 = vmax.f32 %v1293, 0.0
    %v1302 = vmax.f32 %v1294, 0.0
    %v1303 = vmax.f32 %v1295, 0.0
    %v1304 = vsel %vm320, %v1302, 0.0
    %v1305 = vsel %vm321, %v1303, 0.0
    %v1306 = vsel %vm322, %v1296, 0.0
    %v1307 = vsel %vm323, %v1297, 0.0
    %v1308 = vsel %vm324, %v1298, 0.0
    %v1309 = vsel %vm325, %v1299, 0.0
    %v1310 = vsel %vm326, %v1300, 0.0
    %v1311 = vsel %vm327, %v1301, 0.0
    %v1312 = vsel %vm312, %v1303, 0.0
    %v1313 = vsel %vm313, %v1296, 0.0
    %v1314 = vsel %vm314, %v1297, 0.0
    %v1315 = vsel %vm315, %v1298, 0.0
    %v1316 = vsel %vm316, %v1299, 0.0
    %v1317 = vsel %vm317, %v1300, 0.0
    %v1318 = vsel %vm318, %v1301, 0.0
    %v1319 = vsel %vm319, %v1302, 0.0
    %1328 = vrot.lane.b32.xlu0 %v1312, 64
    %v1329 = vpop.permute.xlu0 %1328
    %1330 = vrot.lane.b32.xlu0 %v1313, 64
    %v1331 = vpop.permute.xlu0 %1330
    %1332 = vrot.lane.b32.xlu0 %v1314, 64
    %v1333 = vpop.permute.xlu0 %1332
    %1334 = vrot.lane.b32.xlu0 %v1315, 64
    %v1335 = vpop.permute.xlu0 %1334
    %1336 = vrot.lane.b32.xlu0 %v1316, 64
    %v1337 = vpop.permute.xlu0 %1336
    %1338 = vrot.lane.b32.xlu0 %v1317, 64
    %v1339 = vpop.permute.xlu0 %1338
    %1340 = vrot.lane.b32.xlu0 %v1318, 64
    %v1341 = vpop.permute.xlu0 %1340
    %1342 = vrot.lane.b32.xlu0 %v1319, 64
    %v1343 = vpop.permute.xlu0 %1342
    %1360 = vrot.lane.b32.xlu0 %v1296, 64
    %v1361 = vpop.permute.xlu0 %1360
    %1362 = vrot.lane.b32.xlu0 %v1297, 64
    %v1363 = vpop.permute.xlu0 %1362
    %1364 = vrot.lane.b32.xlu0 %v1298, 64
    %v1365 = vpop.permute.xlu0 %1364
    %1366 = vrot.lane.b32.xlu0 %v1299, 64
    %v1367 = vpop.permute.xlu0 %1366
    %1368 = vrot.lane.b32.xlu0 %v1300, 64
    %v1369 = vpop.permute.xlu0 %1368
    %1370 = vrot.lane.b32.xlu0 %v1301, 64
    %v1371 = vpop.permute.xlu0 %1370
    %1372 = vrot.lane.b32.xlu0 %v1302, 64
    %v1373 = vpop.permute.xlu0 %1372
    %1374 = vrot.lane.b32.xlu0 %v1303, 64
    %v1375 = vpop.permute.xlu0 %1374
    %v1384 = vsel %vm442, %v1304, %v1329
    %v1385 = vsel %vm442, %v1305, %v1331
    %v1386 = vsel %vm442, %v1306, %v1333
    %v1387 = vsel %vm442, %v1307, %v1335
    %v1388 = vsel %vm442, %v1308, %v1337
    %v1389 = vsel %vm442, %v1309, %v1339
    %v1390 = vsel %vm442, %v1310, %v1341
    %v1391 = vsel %vm442, %v1311, %v1343
    %v1392 = vsel %vm442, %v1296, %v1361
    %v1393 = vsel %vm442, %v1297, %v1363
    %v1394 = vsel %vm442, %v1298, %v1365
    %v1395 = vsel %vm442, %v1299, %v1367
    %v1396 = vsel %vm442, %v1300, %v1369
    %v1397 = vsel %vm442, %v1301, %v1371
    %v1398 = vsel %vm442, %v1302, %v1373
    %v1399 = vsel %vm442, %v1303, %v1375
    %s1400 = scalar_lea.vmem [#allocation2], 768
    %v1401 = vld [vmem:[%s1400] sm:$0xff]
    %v1402 = vld [vmem:[%s1400 + $0x8] sm:$0xff]
    %v1403 = vld [vmem:[%s1400 + $0x10] sm:$0xff]
    %v1404 = vld [vmem:[%s1400 + $0x18] sm:$0xff]
    %v1405 = vld [vmem:[%s1400 + $0x20] sm:$0xff]
    %v1406 = vld [vmem:[%s1400 + $0x28] sm:$0xff]
    %v1407 = vld [vmem:[%s1400 + $0x30] sm:$0xff]
    %v1408 = vld [vmem:[%s1400 + $0x38] sm:$0xff]
    %v1409 = vld [vmem:[%s1400 + $0x40] sm:$0xff]
    %v1410 = vld [vmem:[%s1400 + $0x48] sm:$0xff]
    %v1411 = vld [vmem:[%s1400 + $0x50] sm:$0xff]
    %v1412 = vld [vmem:[%s1400 + $0x58] sm:$0xff]
    %v1413 = vld [vmem:[%s1400 + $0x60] sm:$0xff]
    %v1414 = vld [vmem:[%s1400 + $0x68] sm:$0xff]
    %v1415 = vld [vmem:[%s1400 + $0x70] sm:$0xff]
    %v1416 = vld [vmem:[%s1400 + $0x78] sm:$0xff]
    %v1417 = vld [vmem:[%s1400 + $0x80] sm:$0xff]
    %v1418 = vld [vmem:[%s1400 + $0x88] sm:$0xff]
    %v1419 = vld [vmem:[%s1400 + $0x90] sm:$0xff]
    %v1420 = vld [vmem:[%s1400 + $0x98] sm:$0xff]
    %v1421 = vld [vmem:[%s1400 + $0xa0] sm:$0xff]
    %v1422 = vld [vmem:[%s1400 + $0xa8] sm:$0xff]
    %v1423 = vld [vmem:[%s1400 + $0xb0] sm:$0xff]
    %v1424 = vld [vmem:[%s1400 + $0xb8] sm:$0xff]
    %v1425 = vld [vmem:[%s1400 + $0xc0] sm:$0xff]
    %v1426 = vld [vmem:[%s1400 + $0xc8] sm:$0xff]
    %v1427 = vld [vmem:[%s1400 + $0xd0] sm:$0xff]
    %v1428 = vld [vmem:[%s1400 + $0xd8] sm:$0xff]
    %v1429 = vld [vmem:[%s1400 + $0xe0] sm:$0xff]
    %v1430 = vld [vmem:[%s1400 + $0xe8] sm:$0xff]
    %v1431 = vld [vmem:[%s1400 + $0xf0] sm:$0xff]
    %v1432 = vld [vmem:[%s1400 + $0xf8] sm:$0xff]
    %s1433 = scalar_lea.vmem %s5, 3
    %v1434 = vld [vmem:[%s1433] sm:$0x1]
    %v1436 = vlaneseq
    %v1437 = vshrl.u32 %v1436, 7
    %v1438 = vsub.s32 0, %v1437
    %v1439 = vrot.slane %v1434, %v1438
    %1441 = vmatprep.subr.mxu0 0.0
    %1442 = vmatpush1.msra.mxu0 %v1416
    %1443 = vmatprep.subr.mxu0 0.0
    %1444 = vmatpush1.msra.mxu0 %v1415
    %1445 = vmatprep.subr.mxu0 0.0
    %1446 = vmatpush1.msra.mxu0 %v1414
    %1447 = vmatprep.subr.mxu0 0.0
    %1448 = vmatpush1.msra.mxu0 %v1413
    %1449 = vmatprep.subr.mxu0 0.0
    %1450 = vmatpush1.msra.mxu0 %v1412
    %1451 = vmatprep.subr.mxu0 0.0
    %1452 = vmatpush1.msra.mxu0 %v1411
    %1453 = vmatprep.subr.mxu0 0.0
    %1454 = vmatpush1.msra.mxu0 %v1410
    %1455 = vmatprep.subr.mxu0 0.0
    %1456 = vmatpush1.msra.mxu0 %v1409
    %1457 = vmatprep.subr.mxu0 0.0
    %1458 = vmatpush1.msra.mxu0 %v1408
    %1459 = vmatprep.subr.mxu0 0.0
    %1460 = vmatpush1.msra.mxu0 %v1407
    %1461 = vmatprep.subr.mxu0 0.0
    %1462 = vmatpush1.msra.mxu0 %v1406
    %1463 = vmatprep.subr.mxu0 0.0
    %1464 = vmatpush1.msra.mxu0 %v1405
    %1465 = vmatprep.subr.mxu0 0.0
    %1466 = vmatpush1.msra.mxu0 %v1404
    %1467 = vmatprep.subr.mxu0 0.0
    %1468 = vmatpush1.msra.mxu0 %v1403
    %1469 = vmatprep.subr.mxu0 0.0
    %1470 = vmatpush1.msra.mxu0 %v1402
    %1471 = vmatprep.subr.mxu0 0.0
    %1472 = vmatpush1.msra.mxu0 %v1401
    %1473 = vmatprep.subr.mxu0 0.0
    %1474 = vmatpush2.msra.mxu0 %v1432
    %1475 = vmatprep.subr.mxu0 0.0
    %1476 = vmatpush2.msra.mxu0 %v1431
    %1477 = vmatprep.subr.mxu0 0.0
    %1478 = vmatpush2.msra.mxu0 %v1430
    %1479 = vmatprep.subr.mxu0 0.0
    %1480 = vmatpush2.msra.mxu0 %v1429
    %1481 = vmatprep.subr.mxu0 0.0
    %1482 = vmatpush2.msra.mxu0 %v1428
    %1483 = vmatprep.subr.mxu0 0.0
    %1484 = vmatpush2.msra.mxu0 %v1427
    %1485 = vmatprep.subr.mxu0 0.0
    %1486 = vmatpush2.msra.mxu0 %v1426
    %1487 = vmatprep.subr.mxu0 0.0
    %1488 = vmatpush2.msra.mxu0 %v1425
    %1489 = vmatprep.subr.mxu0 0.0
    %1490 = vmatpush2.msra.mxu0 %v1424
    %1491 = vmatprep.subr.mxu0 0.0
    %1492 = vmatpush2.msra.mxu0 %v1423
    %1493 = vmatprep.subr.mxu0 0.0
    %1494 = vmatpush2.msra.mxu0 %v1422
    %1495 = vmatprep.subr.mxu0 0.0
    %1496 = vmatpush2.msra.mxu0 %v1421
    %1497 = vmatprep.subr.mxu0 0.0
    %1498 = vmatpush2.msra.mxu0 %v1420
    %1499 = vmatprep.subr.mxu0 0.0
    %1500 = vmatpush2.msra.mxu0 %v1419
    %1501 = vmatprep.subr.mxu0 0.0
    %1502 = vmatpush2.msra.mxu0 %v1418
    %1503 = vmatprep.subr.mxu0 0.0
    %1504 = vmatpush2.msra.mxu0 %v1417
    %1505 = vmatprep.mubr.f32.mxu0 %v1392
    %1506 = vmatmul.mubr.f32.gmra.mxu0 %v1384
    %v1507 = vpop.f32.mrf.mxu0
    %v1508 = vadd.f32 %v1439, %v1507
    %v1509 = vpop.f32.mrf.mxu0
    %1510 = vmatprep.mubr.f32.mxu0 %v1393
    %1511 = vmatmul.mubr.f32.gmra.mxu0 %v1385
    %v1512 = vpop.f32.mrf.mxu0
    %v1513 = vadd.f32 %v1439, %v1512
    %v1514 = vpop.f32.mrf.mxu0
    %1515 = vmatprep.mubr.f32.mxu0 %v1394
    %1516 = vmatmul.mubr.f32.gmra.mxu0 %v1386
    %v1517 = vpop.f32.mrf.mxu0
    %v1518 = vadd.f32 %v1439, %v1517
    %v1519 = vpop.f32.mrf.mxu0
    %1520 = vmatprep.mubr.f32.mxu0 %v1395
    %1521 = vmatmul.mubr.f32.gmra.mxu0 %v1387
    %v1522 = vpop.f32.mrf.mxu0
    %v1523 = vadd.f32 %v1439, %v1522
    %v1524 = vpop.f32.mrf.mxu0
    %1525 = vmatprep.mubr.f32.mxu0 %v1396
    %1526 = vmatmul.mubr.f32.gmra.mxu0 %v1388
    %v1527 = vpop.f32.mrf.mxu0
    %v1528 = vadd.f32 %v1439, %v1527
    %v1529 = vpop.f32.mrf.mxu0
    %1530 = vmatprep.mubr.f32.mxu0 %v1397
    %1531 = vmatmul.mubr.f32.gmra.mxu0 %v1389
    %v1532 = vpop.f32.mrf.mxu0
    %v1533 = vadd.f32 %v1439, %v1532
    %v1534 = vpop.f32.mrf.mxu0
    %1535 = vmatprep.mubr.f32.mxu0 %v1398
    %1536 = vmatmul.mubr.f32.gmra.mxu0 %v1390
    %v1537 = vpop.f32.mrf.mxu0
    %v1538 = vadd.f32 %v1439, %v1537
    %v1539 = vpop.f32.mrf.mxu0
    %1540 = vmatprep.mubr.f32.mxu0 %v1399
    %1541 = vmatmul.mubr.f32.gmra.mxu0 %v1391
    %v1542 = vpop.f32.mrf.mxu0
    %v1543 = vadd.f32 %v1439, %v1542
    %v1544 = vpop.f32.mrf.mxu0
    %1545 = vdwg.mxu0
    %v1546 = vmax.f32 %v1508, 0.0
    %v1547 = vmax.f32 %v1513, 0.0
    %v1548 = vmax.f32 %v1518, 0.0
    %v1549 = vmax.f32 %v1523, 0.0
    %v1550 = vmax.f32 %v1528, 0.0
    %v1551 = vmax.f32 %v1533, 0.0
    %v1552 = vmax.f32 %v1538, 0.0
    %v1553 = vmax.f32 %v1543, 0.0
    %1562 = vrot.lane.b32.xlu0 %v1508, 64
    %v1563 = vpop.permute.xlu0 %1562
    %1564 = vrot.lane.b32.xlu0 %v1513, 64
    %v1565 = vpop.permute.xlu0 %1564
    %1566 = vrot.lane.b32.xlu0 %v1518, 64
    %v1567 = vpop.permute.xlu0 %1566
    %1568 = vrot.lane.b32.xlu0 %v1523, 64
    %v1569 = vpop.permute.xlu0 %1568
    %1570 = vrot.lane.b32.xlu0 %v1528, 64
    %v1571 = vpop.permute.xlu0 %1570
    %1572 = vrot.lane.b32.xlu0 %v1533, 64
    %v1573 = vpop.permute.xlu0 %1572
    %1574 = vrot.lane.b32.xlu0 %v1538, 64
    %v1575 = vpop.permute.xlu0 %1574
    %1576 = vrot.lane.b32.xlu0 %v1543, 64
    %v1577 = vpop.permute.xlu0 %1576
    %v1586 = vadd.f32 %v1546, %v1563
    %v1587 = vadd.f32 %v1547, %v1565
    %v1588 = vadd.f32 %v1548, %v1567
    %v1589 = vadd.f32 %v1549, %v1569
    %v1590 = vadd.f32 %v1550, %v1571
    %v1591 = vadd.f32 %v1551, %v1573
    %v1592 = vadd.f32 %v1552, %v1575
    %v1593 = vadd.f32 %v1553, %v1577
    %v1594 = vmax.f32 %v1586, 0.0
    %v1595 = vmax.f32 %v1587, 0.0
    %v1596 = vmax.f32 %v1588, 0.0
    %v1597 = vmax.f32 %v1589, 0.0
    %v1598 = vmax.f32 %v1590, 0.0
    %v1599 = vmax.f32 %v1591, 0.0
    %v1600 = vmax.f32 %v1592, 0.0
    %v1601 = vmax.f32 %v1593, 0.0
    %v1602 = vsel %vm442, %v1594, -inf
    %v1603 = vsel %vm442, %v1595, -inf
    %v1604 = vsel %vm442, %v1596, -inf
    %v1605 = vmax.f32 %v1602, %v1604
    %v1606 = vsel %vm442, %v1597, -inf
    %v1607 = vmax.f32 %v1603, %v1606
    %v1608 = vmax.f32 %v1605, %v1607
    %v1609 = vrot.slane %v1608, 4
    %v1610 = vmax.f32 %v1608, %v1609
    %v1611 = vrot.slane %v1610, 2
    %v1612 = vmax.f32 %v1610, %v1611
    %v1613 = vrot.slane %v1612, 1
    %v1614 = vmax.f32 %v1612, %v1613
    %v1615 = vsel %vm442, %v1598, -inf
    %v1616 = vsel %vm442, %v1599, -inf
    %v1617 = vsel %vm442, %v1600, -inf
    %v1618 = vmax.f32 %v1615, %v1617
    %v1619 = vsel %vm442, %v1601, -inf
    %v1620 = vmax.f32 %v1616, %v1619
    %v1621 = vmax.f32 %v1618, %v1620
    %v1622 = vrot.slane %v1621, 4
    %v1623 = vmax.f32 %v1621, %v1622
    %v1624 = vrot.slane %v1623, 2
    %v1625 = vmax.f32 %v1623, %v1624
    %v1626 = vrot.slane %v1625, 1
    %v1627 = vmax.f32 %v1625, %v1626
    %v1628 = vld [vmem:[%s6] sm:$0xff]
    %v1629 = vld [vmem:[%s6 + $0x8] sm:$0xff]
    %v1630 = vld [vmem:[%s6 + $0x10] sm:$0xff]
    %v1631 = vld [vmem:[%s6 + $0x18] sm:$0xff]
    %v1632 = vld [vmem:[%s6 + $0x20] sm:$0xff]
    %v1633 = vld [vmem:[%s6 + $0x28] sm:$0xff]
    %v1634 = vld [vmem:[%s6 + $0x30] sm:$0xff]
    %v1635 = vld [vmem:[%s6 + $0x38] sm:$0xff]
    %v1636 = vld [vmem:[%s1] sm:$0x3]
    %vm1639 = vcmask 1041409
    %v1640 = vsel %vm1639, %v1627, %v1614
    %v1641 = vsel %vm442, %v1640, 0
    %1643 = vmatprep.subr.mxu0 0.0
    %1644 = vmatpush1.msra.mxu0 0.0
    %1645 = vmatprep.subr.mxu0 0.0
    %1646 = vmatpush1.msra.mxu0 0.0
    %1647 = vmatprep.subr.mxu0 0.0
    %1648 = vmatpush1.msra.mxu0 0.0
    %1649 = vmatprep.subr.mxu0 0.0
    %1650 = vmatpush1.msra.mxu0 0.0
    %1651 = vmatprep.subr.mxu0 0.0
    %1652 = vmatpush1.msra.mxu0 0.0
    %1653 = vmatprep.subr.mxu0 0.0
    %1654 = vmatpush1.msra.mxu0 0.0
    %1655 = vmatprep.subr.mxu0 0.0
    %1656 = vmatpush1.msra.mxu0 0.0
    %1657 = vmatprep.subr.mxu0 0.0
    %1658 = vmatpush1.msra.mxu0 0.0
    %1659 = vmatprep.subr.mxu0 0.0
    %1660 = vmatpush1.msra.mxu0 %v1635
    %1661 = vmatprep.subr.mxu0 0.0
    %1662 = vmatpush1.msra.mxu0 %v1634
    %1663 = vmatprep.subr.mxu0 0.0
    %1664 = vmatpush1.msra.mxu0 %v1633
    %1665 = vmatprep.subr.mxu0 0.0
    %1666 = vmatpush1.msra.mxu0 %v1632
    %1667 = vmatprep.subr.mxu0 0.0
    %1668 = vmatpush1.msra.mxu0 %v1631
    %1669 = vmatprep.subr.mxu0 0.0
    %1670 = vmatpush1.msra.mxu0 %v1630
    %1671 = vmatprep.subr.mxu0 0.0
    %1672 = vmatpush1.msra.mxu0 %v1629
    %1673 = vmatprep.subr.mxu0 0.0
    %1674 = vmatpush1.msra.mxu0 %v1628
    %1675 = vmatprep.subr.mxu0 0.0
    %1676 = vmatpush2.msra.mxu0 0.0
    %1677 = vmatprep.subr.mxu0 0.0
    %1678 = vmatpush2.msra.mxu0 0.0
    %1679 = vmatprep.subr.mxu0 0.0
    %1680 = vmatpush2.msra.mxu0 0.0
    %1681 = vmatprep.subr.mxu0 0.0
    %1682 = vmatpush2.msra.mxu0 0.0
    %1683 = vmatprep.subr.mxu0 0.0
    %1684 = vmatpush2.msra.mxu0 0.0
    %1685 = vmatprep.subr.mxu0 0.0
    %1686 = vmatpush2.msra.mxu0 0.0
    %1687 = vmatprep.subr.mxu0 0.0
    %1688 = vmatpush2.msra.mxu0 0.0
    %1689 = vmatprep.subr.mxu0 0.0
    %1690 = vmatpush2.msra.mxu0 0.0
    %1691 = vmatprep.subr.mxu0 0.0
    %1692 = vmatpush2.msra.mxu0 0.0
    %1693 = vmatprep.subr.mxu0 0.0
    %1694 = vmatpush2.msra.mxu0 0.0
    %1695 = vmatprep.subr.mxu0 0.0
    %1696 = vmatpush2.msra.mxu0 0.0
    %1697 = vmatprep.subr.mxu0 0.0
    %1698 = vmatpush2.msra.mxu0 0.0
    %1699 = vmatprep.subr.mxu0 0.0
    %1700 = vmatpush2.msra.mxu0 0.0
    %1701 = vmatprep.subr.mxu0 0.0
    %1702 = vmatpush2.msra.mxu0 0.0
    %1703 = vmatprep.subr.mxu0 0.0
    %1704 = vmatpush2.msra.mxu0 0.0
    %1705 = vmatprep.subr.mxu0 0.0
    %1706 = vmatpush2.msra.mxu0 0.0
    %1707 = vmatprep.mubr.f32.mxu0 0.0
    %1708 = vmatmul.mubr.f32.gmra.mxu0 %v1641
    %v1709 = vpop.f32.mrf.mxu0
    %v1710 = vadd.f32 %v1636, %v1709
    %v1711 = vpop.f32.mrf.mxu0
    %1712 = vdwg.mxu0
    %v1713 = vmax.f32 %v1710, 0.0
    %v1714 = vld [vmem:[%s7] sm:$0xff]
    %v1715 = vld [vmem:[%s7 + $0x8] sm:$0xff]
    %v1716 = vld [vmem:[%s7 + $0x10] sm:$0xff]
    %v1717 = vld [vmem:[%s7 + $0x18] sm:$0xff]
    %v1718 = vld [vmem:[%s7 + $0x20] sm:$0xff]
    %v1719 = vld [vmem:[%s7 + $0x28] sm:$0xff]
    %v1720 = vld [vmem:[%s7 + $0x30] sm:$0xff]
    %v1721 = vld [vmem:[%s7 + $0x38] sm:$0xff]
    %v1722 = vld [vmem:[%s8] sm:$0x1]
    %v1724 = vlaneseq
    %v1725 = vshrl.u32 %v1724, 7
    %v1726 = vsub.s32 0, %v1725
    %v1727 = vrot.slane %v1722, %v1726
    %v1730 = vsel %vm442, %v1713, 0
    %1732 = vmatprep.subr.mxu0 0.0
    %1733 = vmatpush1.msra.mxu0 0.0
    %1734 = vmatprep.subr.mxu0 0.0
    %1735 = vmatpush1.msra.mxu0 0.0
    %1736 = vmatprep.subr.mxu0 0.0
    %1737 = vmatpush1.msra.mxu0 0.0
    %1738 = vmatprep.subr.mxu0 0.0
    %1739 = vmatpush1.msra.mxu0 0.0
    %1740 = vmatprep.subr.mxu0 0.0
    %1741 = vmatpush1.msra.mxu0 0.0
    %1742 = vmatprep.subr.mxu0 0.0
    %1743 = vmatpush1.msra.mxu0 0.0
    %1744 = vmatprep.subr.mxu0 0.0
    %1745 = vmatpush1.msra.mxu0 0.0
    %1746 = vmatprep.subr.mxu0 0.0
    %1747 = vmatpush1.msra.mxu0 0.0
    %1748 = vmatprep.subr.mxu0 0.0
    %1749 = vmatpush1.msra.mxu0 %v1721
    %1750 = vmatprep.subr.mxu0 0.0
    %1751 = vmatpush1.msra.mxu0 %v1720
    %1752 = vmatprep.subr.mxu0 0.0
    %1753 = vmatpush1.msra.mxu0 %v1719
    %1754 = vmatprep.subr.mxu0 0.0
    %1755 = vmatpush1.msra.mxu0 %v1718
    %1756 = vmatprep.subr.mxu0 0.0
    %1757 = vmatpush1.msra.mxu0 %v1717
    %1758 = vmatprep.subr.mxu0 0.0
    %1759 = vmatpush1.msra.mxu0 %v1716
    %1760 = vmatprep.subr.mxu0 0.0
    %1761 = vmatpush1.msra.mxu0 %v1715
    %1762 = vmatprep.subr.mxu0 0.0
    %1763 = vmatpush1.msra.mxu0 %v1714
    %1764 = vmatprep.subr.mxu0 0.0
    %1765 = vmatpush2.msra.mxu0 0.0
    %1766 = vmatprep.subr.mxu0 0.0
    %1767 = vmatpush2.msra.mxu0 0.0
    %1768 = vmatprep.subr.mxu0 0.0
    %1769 = vmatpush2.msra.mxu0 0.0
    %1770 = vmatprep.subr.mxu0 0.0
    %1771 = vmatpush2.msra.mxu0 0.0
    %1772 = vmatprep.subr.mxu0 0.0
    %1773 = vmatpush2.msra.mxu0 0.0
    %1774 = vmatprep.subr.mxu0 0.0
    %1775 = vmatpush2.msra.mxu0 0.0
    %1776 = vmatprep.subr.mxu0 0.0
    %1777 = vmatpush2.msra.mxu0 0.0
    %1778 = vmatprep.subr.mxu0 0.0
    %1779 = vmatpush2.msra.mxu0 0.0
    %1780 = vmatprep.subr.mxu0 0.0
    %1781 = vmatpush2.msra.mxu0 0.0
    %1782 = vmatprep.subr.mxu0 0.0
    %1783 = vmatpush2.msra.mxu0 0.0
    %1784 = vmatprep.subr.mxu0 0.0
    %1785 = vmatpush2.msra.mxu0 0.0
    %1786 = vmatprep.subr.mxu0 0.0
    %1787 = vmatpush2.msra.mxu0 0.0
    %1788 = vmatprep.subr.mxu0 0.0
    %1789 = vmatpush2.msra.mxu0 0.0
    %1790 = vmatprep.subr.mxu0 0.0
    %1791 = vmatpush2.msra.mxu0 0.0
    %1792 = vmatprep.subr.mxu0 0.0
    %1793 = vmatpush2.msra.mxu0 0.0
    %1794 = vmatprep.subr.mxu0 0.0
    %1795 = vmatpush2.msra.mxu0 0.0
    %1796 = vmatprep.mubr.f32.mxu0 0.0
    %1797 = vmatmul.mubr.f32.gmra.mxu0 %v1730
    %v1798 = vpop.f32.mrf.mxu0
    %v1799 = vadd.f32 %v1727, %v1798
    %v1800 = vpop.f32.mrf.mxu0
    %1801 = vdwg.mxu0
    %vm1802 = vcmask 115712
    %1803 = vst.msk [vmem:[#allocation5] sm:$0x3] %vm1802, %v1799
    // Predicated region
    $region42: #{tpu_custom_call.1} parent=1 // pred_check
      _
    $region43: #{tpu_custom_call.1} parent=1 // pred_check_branch
      %1805 = sbr.rel (0) target = $region45
    $region44: #{tpu_custom_call.1} parent=1 // pred_region
      %s1807 = ssub.s32 32, 32
      %1808 = vsyncadd [#allocation4], %s1807
      %s1810 = sshll.u32 [#allocation5], 4
      %s1811 = int_to_ptr.vmem [resolvable:$true] %s1810
      %1813 = dma.vmem_to_hbm [thread:$0]  %s1811, 32, %s9, [#allocation4]
    $region45: #{tpu_custom_call.1} parent=1 // pred_fallthru
      _
    // Predicated region
    $region46: #{tpu_custom_call.1} parent=1 // pred_check
      _
    $region47: #{tpu_custom_call.1} parent=1 // pred_check_branch
      %1815 = sbr.rel (0) target = $region49
    $region48: #{tpu_custom_call.1} parent=1 // pred_region
      %1816 = dma.done [#allocation4], 32
    $region49: #{tpu_custom_call.1} parent=1 // pred_fallthru
      _
    %1817 = vsyncpa [#allocation3], 1
    %1818 = vsyncpa [#allocation4], 1

</llo_original>
